<compile_context>
chip_gen: v5e
topology: v5e:2x2
jax: 0.10.0
libtpu: 0.0.40
codegen_flags: <defaults>
</compile_context>

<pallas_src>
import functools
import math

import jax
import jax.numpy as jnp
from jax.experimental import pallas as pl
from jax.experimental.pallas import tpu as pltpu

EPS = 1e-5  # torch.nn.LayerNorm default


def _layernorm(h, gamma, beta):
    # h: (rows, F) f32; gamma/beta: (1, F).  Centered value computed once and reused.
    mu = jnp.mean(h, axis=-1, keepdims=True)
    c = h - mu
    var = jnp.mean(c * c, axis=-1, keepdims=True)
    return c * jax.lax.rsqrt(var + EPS) * gamma + beta


def encoder_layer_kernel(
    x_ref,
    wq_ref, wk_ref, wv_ref, wo_ref,
    bq_ref, bk_ref, bv_ref, bo_ref,
    g1_ref, be1_ref, g2_ref, be2_ref,
    w1_ref, b1_ref, gf_ref, bf_ref, w2_ref, b2_ref,
    o_ref,
    k_scratch, v_scratch,
    *, num_heads, tile_s, kv_rows,
):
    qi = pl.program_id(1)
    H = num_heads
    S = x_ref.shape[1]
    D = x_ref.shape[2]
    TS = tile_s
    hd = D // H
    scale = 1.0 / math.sqrt(hd)

    # ---- K/V projections: once per batch element (first query tile), processed in row
    #      sub-tiles (static offsets) so the f32 spike is bounded by kv_rows, written
    #      directly into bf16 scratch.  K is stored contraction-ready as (H, hd, S).
    @pl.when(qi == 0)
    def _():
        n_kv = S // kv_rows
        for t in range(n_kv):                                   # static unroll
            r0 = t * kv_rows
            xr = x_ref[0, r0:r0 + kv_rows, :].astype(jnp.bfloat16)            # (R, D)
            k = jnp.dot(xr, wk_ref[...], preferred_element_type=jnp.float32) + bk_ref[...]
            v = jnp.dot(xr, wv_ref[...], preferred_element_type=jnp.float32) + bv_ref[...]
            kh = jnp.transpose(k.reshape(kv_rows, H, hd), (1, 0, 2))          # (H, R, hd)
            k_scratch[:, :, r0:r0 + kv_rows] = jnp.swapaxes(kh, 1, 2).astype(jnp.bfloat16)
            v_scratch[:, r0:r0 + kv_rows, :] = jnp.transpose(
                v.reshape(kv_rows, H, hd), (1, 0, 2)).astype(jnp.bfloat16)    # (H, R, hd)

    # ---- query / residual tile sliced from the per-batch x window (no duplicate input) ----
    q0 = pl.multiple_of(qi * TS, TS)
    x_t = x_ref[0, pl.ds(q0, TS), :]                                          # (TS, D) f32
    x_bf = x_t.astype(jnp.bfloat16)

    # ---- Q projection; fold 1/sqrt(hd) into q (touches TS*D elems instead of TS*S) ----
    q = jnp.dot(x_bf, wq_ref[...], preferred_element_type=jnp.float32) + bq_ref[...]
    q = q * scale
    qh = jnp.transpose(q.reshape(TS, H, hd), (1, 0, 2)).astype(jnp.bfloat16)  # (H, TS, hd)

    # ---- attention: all heads in one batched contraction; f32 softmax statistics;
    #      normalization deferred until after the PV matmul. ----
    s = jnp.einsum("hqd,hds->hqs", qh, k_scratch[...],
                   preferred_element_type=jnp.float32)                        # (H, TS, S)
    s = s - jnp.max(s, axis=-1, keepdims=True)
    p = jnp.exp(s)
    row_sum = jnp.sum(p, axis=-1, keepdims=True)                              # (H, TS, 1)
    o = jnp.einsum("hqs,hsd->hqd", p.astype(jnp.bfloat16), v_scratch[...],
                   preferred_element_type=jnp.float32)                        # (H, TS, hd)
    o = o * pl.reciprocal(row_sum, approx=True)                               # EUP recip
    attn = jnp.transpose(o, (1, 0, 2)).reshape(TS, D)
    attn = jnp.dot(attn.astype(jnp.bfloat16), wo_ref[...],
                   preferred_element_type=jnp.float32) + bo_ref[...]

    # ---- residual + LayerNorm 1 (dropout = identity) ----
    h1 = _layernorm(x_t + attn, g1_ref[...], be1_ref[...])                    # (TS, D)

    # ---- FFN: Linear -> ReLU -> (Dropout) -> LayerNorm -> Linear -> ReLU ----
    f = jnp.dot(h1.astype(jnp.bfloat16), w1_ref[...],
                preferred_element_type=jnp.float32) + b1_ref[...]
    f = jnp.maximum(f, 0.0)
    f = _layernorm(f, gf_ref[...], bf_ref[...])                               # (TS, ff_d)
    f = jnp.dot(f.astype(jnp.bfloat16), w2_ref[...],
                preferred_element_type=jnp.float32) + b2_ref[...]
    f = jnp.maximum(f, 0.0)

    # ---- residual + LayerNorm 2 ----
    o_ref[0] = _layernorm(h1 + f, g2_ref[...], be2_ref[...])                  # (TS, D)


def _vmem_capacity_bytes():
    # Generation-aware physical VMEM (v5e/v6e: 128 MiB, v7x: 64 MiB) with a safe fallback.
    try:
        return int(pltpu.get_tpu_info().vmem_capacity_bytes)
    except Exception:
        return 64 * 1024 * 1024


def _pick_tile_s(S, H, D, ff_d, tile_budget_bytes):
    if S <= 128:
        return S
    for t in (512, 384, 256, 128):
        if S % t != 0:
            continue
        # f32 score + prob tensors dominate the per-tile footprint, plus q/h1/FFN acts.
        per_tile = 4 * (2 * H * t * S + t * (2 * D + 2 * ff_d))
        if per_tile <= tile_budget_bytes:
            return t
    for t in (128, 64, 32, 16, 8):
        if S % t == 0:
            return t
    # TODO(synk): pad S to a multiple of 128 and mask the softmax tail instead of
    #             falling back to tiny tiles for awkward sequence lengths.
    return S


def _pick_kv_rows(S):
    for t in (512, 256, 128):
        if S % t == 0:
            return t
    return S


def prepare_params(params):
    """Cast the matmul weights to bf16 once (MXU-native) instead of on every call."""
    out = dict(params)
    for k in ("wq", "wk", "wv", "wo", "w1", "w2"):
        out[k] = params[k].astype(jnp.bfloat16)
    return out


def encoder_layer(x, params, num_heads):
    B, S, D = x.shape
    assert D % num_heads == 0
    H = num_heads
    hd = D // H
    ff_d = params["w1"].shape[1]

    def _bf16(w):
        return w if w.dtype == jnp.bfloat16 else w.astype(jnp.bfloat16)

    # Matmul weights bf16 (no-op if prepare_params already cast them); biases and
    # LayerNorm params stay f32 (all elementwise math stays f32).
    weights = [
        _bf16(params["wq"]), _bf16(params["wk"]), _bf16(params["wv"]), _bf16(params["wo"]),
        params["bq"], params["bk"], params["bv"], params["bo"],
        params["g1"], params["be1"], params["g2"], params["be2"],
        _bf16(params["w1"]), params["b1"],
        params["gf"], params["bf"],
        _bf16(params["w2"]), params["b2"],
    ]
    weight_bytes = sum(int(w.size) * w.dtype.itemsize for w in weights)

    vmem_cap = int(_vmem_capacity_bytes() * 0.85)   # headroom for compiler temporaries
    kv_scratch_bytes = 2 * H * S * hd * 2           # bf16 K + V scratch
    x_window_bytes = 2 * S * D * 4                  # double-buffered per-batch x window
    fixed_bytes = weight_bytes + kv_scratch_bytes + x_window_bytes

    tile_s = _pick_tile_s(S, H, D, ff_d, max(vmem_cap - fixed_bytes, 4 * 1024 * 1024))
    kv_rows = _pick_kv_rows(S)
    num_tiles = S // tile_s

    # Activation footprint estimate (weights counted once — resident, not pipelined).
    act_bytes = (x_window_bytes + kv_scratch_bytes
                 + 2 * tile_s * D * 4                       # double-buffered output tile
                 + 2 * H * tile_s * S * 4                   # f32 scores + probs
                 + tile_s * (2 * D + 2 * ff_d) * 4          # q / h1 / FFN intermediates
                 + 3 * kv_rows * D * 4)                     # per-sub-tile K/V f32 spike
    vmem_need = int(1.25 * (weight_bytes + act_bytes))
    vmem_limit = int(max(32 * 1024 * 1024, min(vmem_cap, vmem_need)))

    # Advisory cost estimate (helps XLA schedule around the custom call).
    flops = 2 * B * S * D * (4 * D + 2 * ff_d) + 4 * B * H * S * S * hd
    transcendentals = B * H * S * S                          # softmax exp
    bytes_accessed = 2 * B * S * D * 4 + weight_bytes

    weight_specs = [pl.BlockSpec(memory_space=pltpu.MemorySpace.VMEM) for _ in weights]
    in_specs = [pl.BlockSpec((1, S, D), lambda b, qi: (b, 0, 0))] + weight_specs

    kernel = functools.partial(encoder_layer_kernel, num_heads=H,
                               tile_s=tile_s, kv_rows=kv_rows)
    return pl.pallas_call(
        kernel,
        out_shape=jax.ShapeDtypeStruct((B, S, D), jnp.float32),
        grid=(B, num_tiles),
        in_specs=in_specs,
        out_specs=pl.BlockSpec((1, tile_s, D), lambda b, qi: (b, qi, 0)),
        scratch_shapes=[
            pltpu.VMEM((H, hd, S), jnp.bfloat16),    # K, contraction-ready (lane dim = S)
            pltpu.VMEM((H, S, hd), jnp.bfloat16),    # V
        ],
        compiler_params=pltpu.CompilerParams(
            # K/V scratch carries across the tile axis -> "arbitrary"; batch is parallel.
            dimension_semantics=("parallel", "arbitrary"),
            vmem_limit_bytes=vmem_limit,
        ),
        cost_estimate=pl.CostEstimate(
            flops=int(flops),
            transcendentals=int(transcendentals),
            bytes_accessed=int(bytes_accessed),
        ),
    )(x, *weights)


def encoder_layer_ref(x, params, num_heads):
    # Pure-JAX f32 reference (matches the PyTorch module's forward, dropout = identity).
    B, S, D = x.shape
    H = num_heads
    hd = D // H

    def ln(h, g, b):
        mu = h.mean(-1, keepdims=True)
        var = ((h - mu) ** 2).mean(-1, keepdims=True)
        return (h - mu) / jnp.sqrt(var + EPS) * g + b

    q = x @ params["wq"] + params["bq"]
    k = x @ params["wk"] + params["bk"]
    v = x @ params["wv"] + params["bv"]
    q = q.reshape(B, S, H, hd).transpose(0, 2, 1, 3)
    k = k.reshape(B, S, H, hd).transpose(0, 2, 1, 3)
    v = v.reshape(B, S, H, hd).transpose(0, 2, 1, 3)
    s = (q @ k.transpose(0, 1, 3, 2)) / math.sqrt(hd)
    p = jax.nn.softmax(s, axis=-1)
    a = (p @ v).transpose(0, 2, 1, 3).reshape(B, S, D)
    a = a @ params["wo"] + params["bo"]
    h1 = ln(x + a, params["g1"], params["be1"])
    f = jnp.maximum(h1 @ params["w1"] + params["b1"], 0.0)
    f = ln(f, params["gf"], params["bf"])
    f = jnp.maximum(f @ params["w2"] + params["b2"], 0.0)
    return ln(h1 + f, params["g2"], params["be2"])


def init_params(key, d_model, num_heads, ff_d):
    ks = jax.random.split(key, 8)
    s_attn = 1.0 / math.sqrt(d_model)
    s_ff = 1.0 / math.sqrt(ff_d)
    # weights stored already transposed: y = x @ W + b
    return {
        "wq": jax.random.normal(ks[0], (d_model, d_model), jnp.float32) * s_attn,
        "wk": jax.random.normal(ks[1], (d_model, d_model), jnp.float32) * s_attn,
        "wv": jax.random.normal(ks[2], (d_model, d_model), jnp.float32) * s_attn,
        "wo": jax.random.normal(ks[3], (d_model, d_model), jnp.float32) * s_attn,
        "bq": jnp.zeros((1, d_model), jnp.float32),
        "bk": jnp.zeros((1, d_model), jnp.float32),
        "bv": jnp.zeros((1, d_model), jnp.float32),
        "bo": jnp.zeros((1, d_model), jnp.float32),
        "g1": jnp.ones((1, d_model), jnp.float32),
        "be1": jnp.zeros((1, d_model), jnp.float32),
        "g2": jnp.ones((1, d_model), jnp.float32),
        "be2": jnp.zeros((1, d_model), jnp.float32),
        "w1": jax.random.normal(ks[4], (d_model, ff_d), jnp.float32) * s_attn,
        "b1": jax.random.normal(ks[5], (1, ff_d), jnp.float32) * 0.01,
        "gf": jnp.ones((1, ff_d), jnp.float32),
        "bf": jnp.zeros((1, ff_d), jnp.float32),
        "w2": jax.random.normal(ks[6], (ff_d, d_model), jnp.float32) * s_ff,
        "b2": jax.random.normal(ks[7], (1, d_model), jnp.float32) * 0.01,
    }


if __name__ == "__main__":
    B, S, d_model, num_heads, ff_d = 2, 8, 32, 4, 64

    key = jax.random.PRNGKey(0)
    k_x, k_p = jax.random.split(key)
    x = jax.random.normal(k_x, (B, S, d_model), jnp.float32)
    params = init_params(k_p, d_model, num_heads, ff_d)

    # Pre-cast matmul weights to bf16 once (avoids per-call converts + HBM traffic).
    prepared = prepare_params(params)

    out = encoder_layer(x, prepared, num_heads)
    jax.block_until_ready(out)

    assert out.shape == (B, S, d_model)
    assert bool(jnp.all(jnp.isfinite(out)))

    # Sanity vs. f32 pure-JAX reference (loose bound: kernel matmuls are bf16).
    ref = encoder_layer_ref(x, params, num_heads)
    assert float(jnp.max(jnp.abs(out - ref))) < 0.2

    print("KERNEL_OK")
</pallas_src>

<mosaic_0001>
module attributes {stable_mosaic.version = 11 : i64} {
  func.func @encoder_layer_kernel(%arg0: i32, %arg1: i32, %arg2: memref<1x8x32xf32, #tpu.memory_space<vmem>>, %arg3: memref<32x32xbf16, #tpu.memory_space<vmem>>, %arg4: memref<32x32xbf16, #tpu.memory_space<vmem>>, %arg5: memref<32x32xbf16, #tpu.memory_space<vmem>>, %arg6: memref<32x32xbf16, #tpu.memory_space<vmem>>, %arg7: memref<1x32xf32, #tpu.memory_space<vmem>>, %arg8: memref<1x32xf32, #tpu.memory_space<vmem>>, %arg9: memref<1x32xf32, #tpu.memory_space<vmem>>, %arg10: memref<1x32xf32, #tpu.memory_space<vmem>>, %arg11: memref<1x32xf32, #tpu.memory_space<vmem>>, %arg12: memref<1x32xf32, #tpu.memory_space<vmem>>, %arg13: memref<1x32xf32, #tpu.memory_space<vmem>>, %arg14: memref<1x32xf32, #tpu.memory_space<vmem>>, %arg15: memref<32x64xbf16, #tpu.memory_space<vmem>>, %arg16: memref<1x64xf32, #tpu.memory_space<vmem>>, %arg17: memref<1x64xf32, #tpu.memory_space<vmem>>, %arg18: memref<1x64xf32, #tpu.memory_space<vmem>>, %arg19: memref<64x32xbf16, #tpu.memory_space<vmem>>, %arg20: memref<1x32xf32, #tpu.memory_space<vmem>>, %arg21: memref<1x8x32xf32, #tpu.memory_space<vmem>>, %arg22: memref<4x8x8xbf16, #tpu.memory_space<vmem>>, %arg23: memref<4x8x8xbf16, #tpu.memory_space<vmem>>) attributes {dimension_semantics = [#tpu.dimension_semantics<parallel>, #tpu.dimension_semantics<arbitrary>], iteration_bounds = array<i64: 2, 1>, scalar_prefetch = 0 : i64, scratch_operands = 2 : i64, tpu.core_type = #tpu.core_type<tc>, window_params = [{transform_indices = @transform_0, window_bounds = array<i64: 1, 8, 32>}, {pipeline_mode = #tpu.pipeline_mode<synchronous>, transform_indices = @transform_1, window_bounds = array<i64: 32, 32>}, {pipeline_mode = #tpu.pipeline_mode<synchronous>, transform_indices = @transform_2, window_bounds = array<i64: 32, 32>}, {pipeline_mode = #tpu.pipeline_mode<synchronous>, transform_indices = @transform_3, window_bounds = array<i64: 32, 32>}, {pipeline_mode = #tpu.pipeline_mode<synchronous>, transform_indices = @transform_4, window_bounds = array<i64: 32, 32>}, {pipeline_mode = #tpu.pipeline_mode<synchronous>, transform_indices = @transform_5, window_bounds = array<i64: 1, 32>}, {pipeline_mode = #tpu.pipeline_mode<synchronous>, transform_indices = @transform_6, window_bounds = array<i64: 1, 32>}, {pipeline_mode = #tpu.pipeline_mode<synchronous>, transform_indices = @transform_7, window_bounds = array<i64: 1, 32>}, {pipeline_mode = #tpu.pipeline_mode<synchronous>, transform_indices = @transform_8, window_bounds = array<i64: 1, 32>}, {pipeline_mode = #tpu.pipeline_mode<synchronous>, transform_indices = @transform_9, window_bounds = array<i64: 1, 32>}, {pipeline_mode = #tpu.pipeline_mode<synchronous>, transform_indices = @transform_10, window_bounds = array<i64: 1, 32>}, {pipeline_mode = #tpu.pipeline_mode<synchronous>, transform_indices = @transform_11, window_bounds = array<i64: 1, 32>}, {pipeline_mode = #tpu.pipeline_mode<synchronous>, transform_indices = @transform_12, window_bounds = array<i64: 1, 32>}, {pipeline_mode = #tpu.pipeline_mode<synchronous>, transform_indices = @transform_13, window_bounds = array<i64: 32, 64>}, {pipeline_mode = #tpu.pipeline_mode<synchronous>, transform_indices = @transform_14, window_bounds = array<i64: 1, 64>}, {pipeline_mode = #tpu.pipeline_mode<synchronous>, transform_indices = @transform_15, window_bounds = array<i64: 1, 64>}, {pipeline_mode = #tpu.pipeline_mode<synchronous>, transform_indices = @transform_16, window_bounds = array<i64: 1, 64>}, {pipeline_mode = #tpu.pipeline_mode<synchronous>, transform_indices = @transform_17, window_bounds = array<i64: 64, 32>}, {pipeline_mode = #tpu.pipeline_mode<synchronous>, transform_indices = @transform_18, window_bounds = array<i64: 1, 32>}, {transform_indices = @transform_19, window_bounds = array<i64: 1, 8, 32>}]} {
    %c0_i32 = arith.constant 0 : i32
    %0 = arith.cmpi eq, %arg1, %c0_i32 : i32
    %1 = arith.extui %0 : i1 to i32
    %c0_i32_0 = arith.constant 0 : i32
    %2 = arith.cmpi ne, %1, %c0_i32_0 : i32
    scf.if %2 {
      %c0_64 = arith.constant 0 : index
      %c0_65 = arith.constant 0 : index
      %c0_66 = arith.constant 0 : index
      %129 = vector.load %arg2[%c0_64, %c0_65, %c0_66] : memref<1x8x32xf32, #tpu.memory_space<vmem>>, vector<1x8x32xf32>
      %130 = vector.shape_cast %129 : vector<1x8x32xf32> to vector<8x32xf32>
      %131 = arith.truncf %130 : vector<8x32xf32> to vector<8x32xbf16>
      %c0_67 = arith.constant 0 : index
      %c0_68 = arith.constant 0 : index
      %132 = vector.load %arg4[%c0_67, %c0_68] : memref<32x32xbf16, #tpu.memory_space<vmem>>, vector<32x32xbf16>
      %cst_69 = arith.constant dense<0.000000e+00> : vector<8x32xf32>
      %133 = tpu.matmul %131, %132, %cst_69 {dimension_numbers = #tpu.dot_dimension_numbers<[1], [0], [0], [1], [0, 0, 1, 1], [], []>} : vector<8x32xbf16>, vector<32x32xbf16>, vector<8x32xf32> -> vector<8x32xf32>
      %c0_70 = arith.constant 0 : index
      %c0_71 = arith.constant 0 : index
      %134 = vector.load %arg8[%c0_70, %c0_71] : memref<1x32xf32, #tpu.memory_space<vmem>>, vector<1x32xf32>
      %135 = vector.broadcast %134 : vector<1x32xf32> to vector<8x32xf32>
      %136 = arith.addf %133, %135 : vector<8x32xf32>
      %c0_72 = arith.constant 0 : index
      %c0_73 = arith.constant 0 : index
      %137 = vector.load %arg5[%c0_72, %c0_73] : memref<32x32xbf16, #tpu.memory_space<vmem>>, vector<32x32xbf16>
      %cst_74 = arith.constant dense<0.000000e+00> : vector<8x32xf32>
      %138 = tpu.matmul %131, %137, %cst_74 {dimension_numbers = #tpu.dot_dimension_numbers<[1], [0], [0], [1], [0, 0, 1, 1], [], []>} : vector<8x32xbf16>, vector<32x32xbf16>, vector<8x32xf32> -> vector<8x32xf32>
      %c0_75 = arith.constant 0 : index
      %c0_76 = arith.constant 0 : index
      %139 = vector.load %arg9[%c0_75, %c0_76] : memref<1x32xf32, #tpu.memory_space<vmem>>, vector<1x32xf32>
      %140 = vector.broadcast %139 : vector<1x32xf32> to vector<8x32xf32>
      %141 = arith.addf %138, %140 : vector<8x32xf32>
      %142 = vector.shape_cast %136 : vector<8x32xf32> to vector<8x4x8xf32>
      %143 = tpu.transpose %142, [1, 0, 2] : vector<8x4x8xf32> -> vector<4x8x8xf32>
      %144 = tpu.transpose %143, [0, 2, 1] : vector<4x8x8xf32> -> vector<4x8x8xf32>
      %145 = arith.truncf %144 : vector<4x8x8xf32> to vector<4x8x8xbf16>
      %c0_77 = arith.constant 0 : index
      %c0_78 = arith.constant 0 : index
      %c0_79 = arith.constant 0 : index
      %146 = vector.load %arg22[%c0_77, %c0_78, %c0_79] : memref<4x8x8xbf16, #tpu.memory_space<vmem>>, vector<4x8x8xbf16>
      tpu.vector_store %arg22[%c0_77, %c0_78, %c0_79], %145 {strides = array<i32>} : memref<4x8x8xbf16, #tpu.memory_space<vmem>>, vector<4x8x8xbf16>,
      %147 = vector.shape_cast %141 : vector<8x32xf32> to vector<8x4x8xf32>
      %148 = tpu.transpose %147, [1, 0, 2] : vector<8x4x8xf32> -> vector<4x8x8xf32>
      %149 = arith.truncf %148 : vector<4x8x8xf32> to vector<4x8x8xbf16>
      %c0_80 = arith.constant 0 : index
      %c0_81 = arith.constant 0 : index
      %c0_82 = arith.constant 0 : index
      %150 = vector.load %arg23[%c0_80, %c0_81, %c0_82] : memref<4x8x8xbf16, #tpu.memory_space<vmem>>, vector<4x8x8xbf16>
      tpu.vector_store %arg23[%c0_80, %c0_81, %c0_82], %149 {strides = array<i32>} : memref<4x8x8xbf16, #tpu.memory_space<vmem>>, vector<4x8x8xbf16>,
    } else {
    }
    %c8_i32 = arith.constant 8 : i32
    %3 = arith.muli %arg1, %c8_i32 : i32
    %4 = tpu.assume_multiple %3, 8 : i32
    %c0 = arith.constant 0 : index
    %5 = arith.index_cast %4 : i32 to index
    %c0_1 = arith.constant 0 : index
    %6 = vector.load %arg2[%c0, %5, %c0_1] : memref<1x8x32xf32, #tpu.memory_space<vmem>>, vector<1x8x32xf32>
    %7 = vector.shape_cast %6 : vector<1x8x32xf32> to vector<8x32xf32>
    %8 = arith.truncf %7 : vector<8x32xf32> to vector<8x32xbf16>
    %c0_2 = arith.constant 0 : index
    %c0_3 = arith.constant 0 : index
    %9 = vector.load %arg3[%c0_2, %c0_3] : memref<32x32xbf16, #tpu.memory_space<vmem>>, vector<32x32xbf16>
    %cst = arith.constant dense<0.000000e+00> : vector<8x32xf32>
    %10 = tpu.matmul %8, %9, %cst {dimension_numbers = #tpu.dot_dimension_numbers<[1], [0], [0], [1], [0, 0, 1, 1], [], []>} : vector<8x32xbf16>, vector<32x32xbf16>, vector<8x32xf32> -> vector<8x32xf32>
    %c0_4 = arith.constant 0 : index
    %c0_5 = arith.constant 0 : index
    %11 = vector.load %arg7[%c0_4, %c0_5] : memref<1x32xf32, #tpu.memory_space<vmem>>, vector<1x32xf32>
    %12 = vector.broadcast %11 : vector<1x32xf32> to vector<8x32xf32>
    %13 = arith.addf %10, %12 : vector<8x32xf32>
    %cst_6 = arith.constant 0.353553385 : f32
    %14 = vector.broadcast %cst_6 : f32 to vector<8x32xf32>
    %15 = arith.mulf %13, %14 : vector<8x32xf32>
    %16 = vector.shape_cast %15 : vector<8x32xf32> to vector<8x4x8xf32>
    %17 = tpu.transpose %16, [1, 0, 2] : vector<8x4x8xf32> -> vector<4x8x8xf32>
    %18 = arith.truncf %17 : vector<4x8x8xf32> to vector<4x8x8xbf16>
    %c0_7 = arith.constant 0 : index
    %c0_8 = arith.constant 0 : index
    %c0_9 = arith.constant 0 : index
    %19 = vector.load %arg22[%c0_7, %c0_8, %c0_9] : memref<4x8x8xbf16, #tpu.memory_space<vmem>>, vector<4x8x8xbf16>
    "tpu.trace_start"() <{level = 10 : i32, message = "hqd,hds->hqs"}> : () -> ()
    %cst_10 = arith.constant dense<0.000000e+00> : vector<4x8x8xf32>
    %20 = tpu.matmul %18, %19, %cst_10 {dimension_numbers = #tpu.dot_dimension_numbers<[2], [1], [1], [2], [0, 0, 0, 1, 1, 2], [0], [0]>} : vector<4x8x8xbf16>, vector<4x8x8xbf16>, vector<4x8x8xf32> -> vector<4x8x8xf32>
    "tpu.trace_stop"() : () -> ()
    %cst_11 = arith.constant dense<0xFF800000> : vector<4x8xf32>
    %21 = vector.multi_reduction <maximumf>, %20, %cst_11 [2] : vector<4x8x8xf32> to vector<4x8xf32>
    %22 = vector.shape_cast %21 : vector<4x8xf32> to vector<4x8x1xf32>
    %23 = vector.broadcast %22 : vector<4x8x1xf32> to vector<4x8x8xf32>
    %24 = arith.subf %20, %23 : vector<4x8x8xf32>
    %25 = math.exp %24 : vector<4x8x8xf32>
    %cst_12 = arith.constant dense<0.000000e+00> : vector<4x8xf32>
    %26 = vector.multi_reduction <add>, %25, %cst_12 [2] : vector<4x8x8xf32> to vector<4x8xf32>
    %27 = vector.shape_cast %26 : vector<4x8xf32> to vector<4x8x1xf32>
    %28 = arith.truncf %25 : vector<4x8x8xf32> to vector<4x8x8xbf16>
    %c0_13 = arith.constant 0 : index
    %c0_14 = arith.constant 0 : index
    %c0_15 = arith.constant 0 : index
    %29 = vector.load %arg23[%c0_13, %c0_14, %c0_15] : memref<4x8x8xbf16, #tpu.memory_space<vmem>>, vector<4x8x8xbf16>
    "tpu.trace_start"() <{level = 10 : i32, message = "hqs,hsd->hqd"}> : () -> ()
    %cst_16 = arith.constant dense<0.000000e+00> : vector<4x8x8xf32>
    %30 = tpu.matmul %28, %29, %cst_16 {dimension_numbers = #tpu.dot_dimension_numbers<[2], [1], [1], [2], [0, 0, 0, 1, 1, 2], [0], [0]>} : vector<4x8x8xbf16>, vector<4x8x8xbf16>, vector<4x8x8xf32> -> vector<4x8x8xf32>
    "tpu.trace_stop"() : () -> ()
    %31 = tpu.reciprocal %27 {approx = true} : vector<4x8x1xf32> -> vector<4x8x1xf32>
    %32 = vector.broadcast %31 : vector<4x8x1xf32> to vector<4x8x8xf32>
    %33 = arith.mulf %30, %32 : vector<4x8x8xf32>
    %34 = tpu.transpose %33, [1, 0, 2] : vector<4x8x8xf32> -> vector<8x4x8xf32>
    %35 = vector.shape_cast %34 : vector<8x4x8xf32> to vector<8x32xf32>
    %36 = arith.truncf %35 : vector<8x32xf32> to vector<8x32xbf16>
    %c0_17 = arith.constant 0 : index
    %c0_18 = arith.constant 0 : index
    %37 = vector.load %arg6[%c0_17, %c0_18] : memref<32x32xbf16, #tpu.memory_space<vmem>>, vector<32x32xbf16>
    %cst_19 = arith.constant dense<0.000000e+00> : vector<8x32xf32>
    %38 = tpu.matmul %36, %37, %cst_19 {dimension_numbers = #tpu.dot_dimension_numbers<[1], [0], [0], [1], [0, 0, 1, 1], [], []>} : vector<8x32xbf16>, vector<32x32xbf16>, vector<8x32xf32> -> vector<8x32xf32>
    %c0_20 = arith.constant 0 : index
    %c0_21 = arith.constant 0 : index
    %39 = vector.load %arg10[%c0_20, %c0_21] : memref<1x32xf32, #tpu.memory_space<vmem>>, vector<1x32xf32>
    %40 = vector.broadcast %39 : vector<1x32xf32> to vector<8x32xf32>
    %41 = arith.addf %38, %40 : vector<8x32xf32>
    %42 = arith.addf %7, %41 : vector<8x32xf32>
    %c0_22 = arith.constant 0 : index
    %c0_23 = arith.constant 0 : index
    %43 = vector.load %arg11[%c0_22, %c0_23] : memref<1x32xf32, #tpu.memory_space<vmem>>, vector<1x32xf32>
    %c0_24 = arith.constant 0 : index
    %c0_25 = arith.constant 0 : index
    %44 = vector.load %arg12[%c0_24, %c0_25] : memref<1x32xf32, #tpu.memory_space<vmem>>, vector<1x32xf32>
    %cst_26 = arith.constant dense<0.000000e+00> : vector<8xf32>
    %45 = vector.multi_reduction <add>, %42, %cst_26 [1] : vector<8x32xf32> to vector<8xf32>
    %46 = vector.shape_cast %45 : vector<8xf32> to vector<8x1xf32>
    %cst_27 = arith.constant 3.200000e+01 : f32
    %47 = vector.broadcast %cst_27 : f32 to vector<8x1xf32>
    %48 = arith.divf %46, %47 : vector<8x1xf32>
    %49 = vector.broadcast %48 : vector<8x1xf32> to vector<8x32xf32>
    %50 = arith.subf %42, %49 : vector<8x32xf32>
    %51 = arith.mulf %50, %50 : vector<8x32xf32>
    %cst_28 = arith.constant dense<0.000000e+00> : vector<8xf32>
    %52 = vector.multi_reduction <add>, %51, %cst_28 [1] : vector<8x32xf32> to vector<8xf32>
    %53 = vector.shape_cast %52 : vector<8xf32> to vector<8x1xf32>
    %cst_29 = arith.constant 3.200000e+01 : f32
    %54 = vector.broadcast %cst_29 : f32 to vector<8x1xf32>
    %55 = arith.divf %53, %54 : vector<8x1xf32>
    %cst_30 = arith.constant 9.99999974E-6 : f32
    %56 = vector.broadcast %cst_30 : f32 to vector<8x1xf32>
    %57 = arith.addf %55, %56 : vector<8x1xf32>
    %58 = math.rsqrt %57 : vector<8x1xf32>
    %59 = vector.broadcast %58 : vector<8x1xf32> to vector<8x32xf32>
    %60 = arith.mulf %50, %59 : vector<8x32xf32>
    %61 = vector.broadcast %43 : vector<1x32xf32> to vector<8x32xf32>
    %62 = arith.mulf %60, %61 : vector<8x32xf32>
    %63 = vector.broadcast %44 : vector<1x32xf32> to vector<8x32xf32>
    %64 = arith.addf %62, %63 : vector<8x32xf32>
    %65 = arith.truncf %64 : vector<8x32xf32> to vector<8x32xbf16>
    %c0_31 = arith.constant 0 : index
    %c0_32 = arith.constant 0 : index
    %66 = vector.load %arg15[%c0_31, %c0_32] : memref<32x64xbf16, #tpu.memory_space<vmem>>, vector<32x64xbf16>
    %cst_33 = arith.constant dense<0.000000e+00> : vector<8x64xf32>
    %67 = tpu.matmul %65, %66, %cst_33 {dimension_numbers = #tpu.dot_dimension_numbers<[1], [0], [0], [1], [0, 0, 1, 1], [], []>} : vector<8x32xbf16>, vector<32x64xbf16>, vector<8x64xf32> -> vector<8x64xf32>
    %c0_34 = arith.constant 0 : index
    %c0_35 = arith.constant 0 : index
    %68 = vector.load %arg16[%c0_34, %c0_35] : memref<1x64xf32, #tpu.memory_space<vmem>>, vector<1x64xf32>
    %69 = vector.broadcast %68 : vector<1x64xf32> to vector<8x64xf32>
    %70 = arith.addf %67, %69 : vector<8x64xf32>
    %cst_36 = arith.constant 0.000000e+00 : f32
    %71 = vector.broadcast %cst_36 : f32 to vector<8x64xf32>
    %72 = arith.maximumf %70, %71 : vector<8x64xf32>
    %c0_37 = arith.constant 0 : index
    %c0_38 = arith.constant 0 : index
    %73 = vector.load %arg17[%c0_37, %c0_38] : memref<1x64xf32, #tpu.memory_space<vmem>>, vector<1x64xf32>
    %c0_39 = arith.constant 0 : index
    %c0_40 = arith.constant 0 : index
    %74 = vector.load %arg18[%c0_39, %c0_40] : memref<1x64xf32, #tpu.memory_space<vmem>>, vector<1x64xf32>
    %cst_41 = arith.constant dense<0.000000e+00> : vector<8xf32>
    %75 = vector.multi_reduction <add>, %72, %cst_41 [1] : vector<8x64xf32> to vector<8xf32>
    %76 = vector.shape_cast %75 : vector<8xf32> to vector<8x1xf32>
    %cst_42 = arith.constant 6.400000e+01 : f32
    %77 = vector.broadcast %cst_42 : f32 to vector<8x1xf32>
    %78 = arith.divf %76, %77 : vector<8x1xf32>
    %79 = vector.broadcast %78 : vector<8x1xf32> to vector<8x64xf32>
    %80 = arith.subf %72, %79 : vector<8x64xf32>
    %81 = arith.mulf %80, %80 : vector<8x64xf32>
    %cst_43 = arith.constant dense<0.000000e+00> : vector<8xf32>
    %82 = vector.multi_reduction <add>, %81, %cst_43 [1] : vector<8x64xf32> to vector<8xf32>
    %83 = vector.shape_cast %82 : vector<8xf32> to vector<8x1xf32>
    %cst_44 = arith.constant 6.400000e+01 : f32
    %84 = vector.broadcast %cst_44 : f32 to vector<8x1xf32>
    %85 = arith.divf %83, %84 : vector<8x1xf32>
    %cst_45 = arith.constant 9.99999974E-6 : f32
    %86 = vector.broadcast %cst_45 : f32 to vector<8x1xf32>
    %87 = arith.addf %85, %86 : vector<8x1xf32>
    %88 = math.rsqrt %87 : vector<8x1xf32>
    %89 = vector.broadcast %88 : vector<8x1xf32> to vector<8x64xf32>
    %90 = arith.mulf %80, %89 : vector<8x64xf32>
    %91 = vector.broadcast %73 : vector<1x64xf32> to vector<8x64xf32>
    %92 = arith.mulf %90, %91 : vector<8x64xf32>
    %93 = vector.broadcast %74 : vector<1x64xf32> to vector<8x64xf32>
    %94 = arith.addf %92, %93 : vector<8x64xf32>
    %95 = arith.truncf %94 : vector<8x64xf32> to vector<8x64xbf16>
    %c0_46 = arith.constant 0 : index
    %c0_47 = arith.constant 0 : index
    %96 = vector.load %arg19[%c0_46, %c0_47] : memref<64x32xbf16, #tpu.memory_space<vmem>>, vector<64x32xbf16>
    %cst_48 = arith.constant dense<0.000000e+00> : vector<8x32xf32>
    %97 = tpu.matmul %95, %96, %cst_48 {dimension_numbers = #tpu.dot_dimension_numbers<[1], [0], [0], [1], [0, 0, 1, 1], [], []>} : vector<8x64xbf16>, vector<64x32xbf16>, vector<8x32xf32> -> vector<8x32xf32>
    %c0_49 = arith.constant 0 : index
    %c0_50 = arith.constant 0 : index
    %98 = vector.load %arg20[%c0_49, %c0_50] : memref<1x32xf32, #tpu.memory_space<vmem>>, vector<1x32xf32>
    %99 = vector.broadcast %98 : vector<1x32xf32> to vector<8x32xf32>
    %100 = arith.addf %97, %99 : vector<8x32xf32>
    %cst_51 = arith.constant 0.000000e+00 : f32
    %101 = vector.broadcast %cst_51 : f32 to vector<8x32xf32>
    %102 = arith.maximumf %100, %101 : vector<8x32xf32>
    %103 = arith.addf %64, %102 : vector<8x32xf32>
    %c0_52 = arith.constant 0 : index
    %c0_53 = arith.constant 0 : index
    %104 = vector.load %arg13[%c0_52, %c0_53] : memref<1x32xf32, #tpu.memory_space<vmem>>, vector<1x32xf32>
    %c0_54 = arith.constant 0 : index
    %c0_55 = arith.constant 0 : index
    %105 = vector.load %arg14[%c0_54, %c0_55] : memref<1x32xf32, #tpu.memory_space<vmem>>, vector<1x32xf32>
    %cst_56 = arith.constant dense<0.000000e+00> : vector<8xf32>
    %106 = vector.multi_reduction <add>, %103, %cst_56 [1] : vector<8x32xf32> to vector<8xf32>
    %107 = vector.shape_cast %106 : vector<8xf32> to vector<8x1xf32>
    %cst_57 = arith.constant 3.200000e+01 : f32
    %108 = vector.broadcast %cst_57 : f32 to vector<8x1xf32>
    %109 = arith.divf %107, %108 : vector<8x1xf32>
    %110 = vector.broadcast %109 : vector<8x1xf32> to vector<8x32xf32>
    %111 = arith.subf %103, %110 : vector<8x32xf32>
    %112 = arith.mulf %111, %111 : vector<8x32xf32>
    %cst_58 = arith.constant dense<0.000000e+00> : vector<8xf32>
    %113 = vector.multi_reduction <add>, %112, %cst_58 [1] : vector<8x32xf32> to vector<8xf32>
    %114 = vector.shape_cast %113 : vector<8xf32> to vector<8x1xf32>
    %cst_59 = arith.constant 3.200000e+01 : f32
    %115 = vector.broadcast %cst_59 : f32 to vector<8x1xf32>
    %116 = arith.divf %114, %115 : vector<8x1xf32>
    %cst_60 = arith.constant 9.99999974E-6 : f32
    %117 = vector.broadcast %cst_60 : f32 to vector<8x1xf32>
    %118 = arith.addf %116, %117 : vector<8x1xf32>
    %119 = math.rsqrt %118 : vector<8x1xf32>
    %120 = vector.broadcast %119 : vector<8x1xf32> to vector<8x32xf32>
    %121 = arith.mulf %111, %120 : vector<8x32xf32>
    %122 = vector.broadcast %104 : vector<1x32xf32> to vector<8x32xf32>
    %123 = arith.mulf %121, %122 : vector<8x32xf32>
    %124 = vector.broadcast %105 : vector<1x32xf32> to vector<8x32xf32>
    %125 = arith.addf %123, %124 : vector<8x32xf32>
    %c0_61 = arith.constant 0 : index
    %c0_62 = arith.constant 0 : index
    %c0_63 = arith.constant 0 : index
    %126 = vector.load %arg21[%c0_61, %c0_62, %c0_63] : memref<1x8x32xf32, #tpu.memory_space<vmem>>, vector<1x8x32xf32>
    %127 = vector.shape_cast %126 : vector<1x8x32xf32> to vector<8x32xf32>
    %128 = vector.shape_cast %125 : vector<8x32xf32> to vector<1x8x32xf32>
    tpu.vector_store %arg21[%c0_61, %c0_62, %c0_63], %128 {strides = array<i32>} : memref<1x8x32xf32, #tpu.memory_space<vmem>>, vector<1x8x32xf32>,
    return
  }
  func.func @transform_0(%arg0: i32, %arg1: i32) -> (i32, i32, i32) {
    %c0_i32 = arith.constant 0 : i32
    %c0_i32_0 = arith.constant 0 : i32
    %c0_i32_1 = arith.constant 0 : i32
    return %arg0, %c0_i32, %c0_i32_0 : i32, i32, i32
  }
  func.func @transform_1(%arg0: i32, %arg1: i32) -> (i32, i32) {
    %c0_i32 = arith.constant 0 : i32
    %c0_i32_0 = arith.constant 0 : i32
    %c0_i32_1 = arith.constant 0 : i32
    return %c0_i32, %c0_i32_0 : i32, i32
  }
  func.func @transform_2(%arg0: i32, %arg1: i32) -> (i32, i32) {
    %c0_i32 = arith.constant 0 : i32
    %c0_i32_0 = arith.constant 0 : i32
    %c0_i32_1 = arith.constant 0 : i32
    return %c0_i32, %c0_i32_0 : i32, i32
  }
  func.func @transform_3(%arg0: i32, %arg1: i32) -> (i32, i32) {
    %c0_i32 = arith.constant 0 : i32
    %c0_i32_0 = arith.constant 0 : i32
    %c0_i32_1 = arith.constant 0 : i32
    return %c0_i32, %c0_i32_0 : i32, i32
  }
  func.func @transform_4(%arg0: i32, %arg1: i32) -> (i32, i32) {
    %c0_i32 = arith.constant 0 : i32
    %c0_i32_0 = arith.constant 0 : i32
    %c0_i32_1 = arith.constant 0 : i32
    return %c0_i32, %c0_i32_0 : i32, i32
  }
  func.func @transform_5(%arg0: i32, %arg1: i32) -> (i32, i32) {
    %c0_i32 = arith.constant 0 : i32
    %c0_i32_0 = arith.constant 0 : i32
    %c0_i32_1 = arith.constant 0 : i32
    return %c0_i32, %c0_i32_0 : i32, i32
  }
  func.func @transform_6(%arg0: i32, %arg1: i32) -> (i32, i32) {
    %c0_i32 = arith.constant 0 : i32
    %c0_i32_0 = arith.constant 0 : i32
    %c0_i32_1 = arith.constant 0 : i32
    return %c0_i32, %c0_i32_0 : i32, i32
  }
  func.func @transform_7(%arg0: i32, %arg1: i32) -> (i32, i32) {
    %c0_i32 = arith.constant 0 : i32
    %c0_i32_0 = arith.constant 0 : i32
    %c0_i32_1 = arith.constant 0 : i32
    return %c0_i32, %c0_i32_0 : i32, i32
  }
  func.func @transform_8(%arg0: i32, %arg1: i32) -> (i32, i32) {
    %c0_i32 = arith.constant 0 : i32
    %c0_i32_0 = arith.constant 0 : i32
    %c0_i32_1 = arith.constant 0 : i32
    return %c0_i32, %c0_i32_0 : i32, i32
  }
  func.func @transform_9(%arg0: i32, %arg1: i32) -> (i32, i32) {
    %c0_i32 = arith.constant 0 : i32
    %c0_i32_0 = arith.constant 0 : i32
    %c0_i32_1 = arith.constant 0 : i32
    return %c0_i32, %c0_i32_0 : i32, i32
  }
  func.func @transform_10(%arg0: i32, %arg1: i32) -> (i32, i32) {
    %c0_i32 = arith.constant 0 : i32
    %c0_i32_0 = arith.constant 0 : i32
    %c0_i32_1 = arith.constant 0 : i32
    return %c0_i32, %c0_i32_0 : i32, i32
  }
  func.func @transform_11(%arg0: i32, %arg1: i32) -> (i32, i32) {
    %c0_i32 = arith.constant 0 : i32
    %c0_i32_0 = arith.constant 0 : i32
    %c0_i32_1 = arith.constant 0 : i32
    return %c0_i32, %c0_i32_0 : i32, i32
  }
  func.func @transform_12(%arg0: i32, %arg1: i32) -> (i32, i32) {
    %c0_i32 = arith.constant 0 : i32
    %c0_i32_0 = arith.constant 0 : i32
    %c0_i32_1 = arith.constant 0 : i32
    return %c0_i32, %c0_i32_0 : i32, i32
  }
  func.func @transform_13(%arg0: i32, %arg1: i32) -> (i32, i32) {
    %c0_i32 = arith.constant 0 : i32
    %c0_i32_0 = arith.constant 0 : i32
    %c0_i32_1 = arith.constant 0 : i32
    return %c0_i32, %c0_i32_0 : i32, i32
  }
  func.func @transform_14(%arg0: i32, %arg1: i32) -> (i32, i32) {
    %c0_i32 = arith.constant 0 : i32
    %c0_i32_0 = arith.constant 0 : i32
    %c0_i32_1 = arith.constant 0 : i32
    return %c0_i32, %c0_i32_0 : i32, i32
  }
  func.func @transform_15(%arg0: i32, %arg1: i32) -> (i32, i32) {
    %c0_i32 = arith.constant 0 : i32
    %c0_i32_0 = arith.constant 0 : i32
    %c0_i32_1 = arith.constant 0 : i32
    return %c0_i32, %c0_i32_0 : i32, i32
  }
  func.func @transform_16(%arg0: i32, %arg1: i32) -> (i32, i32) {
    %c0_i32 = arith.constant 0 : i32
    %c0_i32_0 = arith.constant 0 : i32
    %c0_i32_1 = arith.constant 0 : i32
    return %c0_i32, %c0_i32_0 : i32, i32
  }
  func.func @transform_17(%arg0: i32, %arg1: i32) -> (i32, i32) {
    %c0_i32 = arith.constant 0 : i32
    %c0_i32_0 = arith.constant 0 : i32
    %c0_i32_1 = arith.constant 0 : i32
    return %c0_i32, %c0_i32_0 : i32, i32
  }
  func.func @transform_18(%arg0: i32, %arg1: i32) -> (i32, i32) {
    %c0_i32 = arith.constant 0 : i32
    %c0_i32_0 = arith.constant 0 : i32
    %c0_i32_1 = arith.constant 0 : i32
    return %c0_i32, %c0_i32_0 : i32, i32
  }
  func.func @transform_19(%arg0: i32, %arg1: i32) -> (i32, i32, i32) {
    %c0_i32 = arith.constant 0 : i32
    %c0_i32_0 = arith.constant 0 : i32
    return %arg0, %arg1, %c0_i32 : i32, i32, i32
  }
}

</mosaic_0001>

<llo_original>
// kernel: tpu_custom_call.1
$region0: #{tpu_custom_call.1}
  #allocation0 [shape = 'u32[]', space=smem, size = 0x4, offset = 0x4, fixed_abs, tag = 'smem constant byte address 0x4 - core index']
  #allocation1 [shape = 'u32[72,128]{1,0:T(1,128)}', space=vmem, size = 0x9000, scoped, tag = 'internal scratch']
  #allocation2 [shape = 'bf16[4,8,8]{2,1,0:T(8,128)(2,1)}', space=vmem, size = 0x2000, scoped, tag = 'scratch operand']
  #allocation3 [shape = 'bf16[4,8,8]{2,1,0:T(8,128)(2,1)}', space=vmem, size = 0x2000, scoped, tag = 'scratch operand']
  %s0 = inlined_call_operand.vmem [shape: f32[2,8,32], index: 0, kind: input, shape index: {}]
  %s1 = inlined_call_operand.vmem [shape: bf16[32,32], index: 1, kind: input, shape index: {}]
  %s2 = inlined_call_operand.vmem [shape: bf16[32,32], index: 2, kind: input, shape index: {}]
  %s3 = inlined_call_operand.hbm [shape: bf16[32,32], index: 3, kind: input, shape index: {}]
  %s4 = inlined_call_operand.hbm [shape: bf16[32,32], index: 4, kind: input, shape index: {}]
  %s5 = inlined_call_operand.hbm [shape: f32[1,32], index: 5, kind: input, shape index: {}]
  %s6 = inlined_call_operand.hbm [shape: f32[1,32], index: 6, kind: input, shape index: {}]
  %s7 = inlined_call_operand.hbm [shape: f32[1,32], index: 7, kind: input, shape index: {}]
  %s8 = inlined_call_operand.hbm [shape: f32[1,32], index: 8, kind: input, shape index: {}]
  %s9 = inlined_call_operand.hbm [shape: f32[1,32], index: 9, kind: input, shape index: {}]
  %s10 = inlined_call_operand.hbm [shape: f32[1,32], index: 10, kind: input, shape index: {}]
  %s11 = inlined_call_operand.hbm [shape: f32[1,32], index: 11, kind: input, shape index: {}]
  %s12 = inlined_call_operand.hbm [shape: f32[1,32], index: 12, kind: input, shape index: {}]
  %s13 = inlined_call_operand.hbm [shape: bf16[32,64], index: 13, kind: input, shape index: {}]
  %s14 = inlined_call_operand.hbm [shape: f32[1,64], index: 14, kind: input, shape index: {}]
  %s15 = inlined_call_operand.hbm [shape: f32[1,64], index: 15, kind: input, shape index: {}]
  %s16 = inlined_call_operand.hbm [shape: f32[1,64], index: 16, kind: input, shape index: {}]
  %s17 = inlined_call_operand.vmem [shape: bf16[64,32], index: 17, kind: input, shape index: {}]
  %s18 = inlined_call_operand.vmem [shape: f32[1,32], index: 18, kind: input, shape index: {}]
  %s19 = inlined_call_operand.hbm [shape: f32[2,8,32], index: 19, kind: output, shape index: {}]
  %s20 = sld [smem:[#allocation0]]
  $region169: #{tpu_custom_call.1} parent=0
    _
  %s22 = ssub.s32 1, %s20
  %s23 = scalar_select 0, %s22, %s20
  $region1: #{tpu_custom_call.1} parent=0
    #allocation4 [shape = 'u8[8192]{0}', space=vmem, size = 0x2000, scoped, tag = 'input window, operand 3, single buffered']
    #allocation5 [shape = 's32[2]{0}', space=sflag, size = 0x8, scoped, tag = 'scoped memory for tpu_custom_call.1']
    #allocation6 [shape = 's32[2]{0}', space=sflag, size = 0x8, scoped, tag = 'scoped memory for tpu_custom_call.1']
    #allocation7 [shape = 'u8[8192]{0}', space=vmem, size = 0x2000, scoped, tag = 'input window, operand 4, single buffered']
    #allocation8 [shape = 's32[1]{0}', space=sflag, size = 0x4, scoped, tag = 'scoped memory for tpu_custom_call.1']
    #allocation9 [shape = 'u8[512]{0}', space=vmem, size = 0x400, scoped, tag = 'input window, operand 5, single buffered']
    #allocation10 [shape = 'u8[512]{0}', space=vmem, size = 0x400, scoped, tag = 'input window, operand 6, single buffered']
    #allocation11 [shape = 's32[1]{0}', space=sflag, size = 0x4, scoped, tag = 'scoped memory for tpu_custom_call.1']
    #allocation12 [shape = 'u8[512]{0}', space=vmem, size = 0x400, scoped, tag = 'input window, operand 7, single buffered']
    #allocation13 [shape = 'u8[512]{0}', space=vmem, size = 0x400, scoped, tag = 'input window, operand 8, single buffered']
    #allocation14 [shape = 's32[1]{0}', space=sflag, size = 0x4, scoped, tag = 'scoped memory for tpu_custom_call.1']
    #allocation15 [shape = 'u8[512]{0}', space=vmem, size = 0x400, scoped, tag = 'input window, operand 9, single buffered']
    #allocation16 [shape = 'u8[512]{0}', space=vmem, size = 0x400, scoped, tag = 'input window, operand 10, single buffered']
    #allocation17 [shape = 's32[1]{0}', space=sflag, size = 0x4, scoped, tag = 'scoped memory for tpu_custom_call.1']
    #allocation18 [shape = 'u8[512]{0}', space=vmem, size = 0x400, scoped, tag = 'input window, operand 11, single buffered']
    #allocation19 [shape = 'u8[512]{0}', space=vmem, size = 0x400, scoped, tag = 'input window, operand 12, single buffered']
    #allocation20 [shape = 's32[1]{0}', space=sflag, size = 0x4, scoped, tag = 'scoped memory for tpu_custom_call.1']
    #allocation21 [shape = 'u8[8192]{0}', space=vmem, size = 0x2000, scoped, tag = 'input window, operand 13, single buffered']
    #allocation22 [shape = 'u8[512]{0}', space=vmem, size = 0x400, scoped, tag = 'input window, operand 14, single buffered']
    #allocation23 [shape = 's32[1]{0}', space=sflag, size = 0x4, scoped, tag = 'scoped memory for tpu_custom_call.1']
    #allocation24 [shape = 'u8[512]{0}', space=vmem, size = 0x400, scoped, tag = 'input window, operand 15, single buffered']
    #allocation25 [shape = 'u8[512]{0}', space=vmem, size = 0x400, scoped, tag = 'input window, operand 16, single buffered']
    #allocation26 [shape = 's32[1]{0}', space=sflag, size = 0x4, scoped, tag = 'scoped memory for tpu_custom_call.1']
    #allocation27 [shape = 'u8[8192]{0}', space=vmem, size = 0x2000, scoped, tag = 'output window, operand 0']
    %24 = vsyncpa [#allocation5], 0
    %25 = vsyncpa [#allocation8], 0
    %26 = vsyncpa [#allocation11], 0
    %27 = vsyncpa [#allocation14], 0
    %28 = vsyncpa [#allocation17], 0
    %29 = vsyncpa [#allocation20], 0
    %30 = vsyncpa [#allocation23], 0
    %31 = vsyncpa [#allocation26], 0
    %32 = vsyncpa [#allocation6], 0
    %s33 = scalar_lea.sflag [#allocation6], 1
    %34 = vsyncpa %s33, 0
    loop: start=0, step=1, limit=4
    $region2: #{tpu_custom_call.1} parent=1 // loop_pre_header
      _
    $region3: #{tpu_custom_call.1} parent=1 // loop_header
      %s36 = sphi 0, %s40
      %p37 = scmp.ge.s32.totalorder %s36, 4
      %s43 = sphi 0, %s55
      %s44 = sphi 0, %s51
      %s45 = sphi 0, %s43
      %s46 = sphi 0, %s44
      %s47 = sphi 0, %s45
      %s48 = sphi 0, %s46
      %s58 = sphi 0, %s60
      %s61 = sphi 0, %s58
      %s62 = sphi 0, %s61
      %s78 = sphi 0, %s62
      %s82 = sphi 0, %s82
      %s84 = sphi 0, %s82
      %s85 = sphi 0, %s84
      %s99 = sphi 0, %s85
      %s103 = sphi 0, %s103
      %s105 = sphi 0, %s103
      %s106 = sphi 0, %s105
      %s120 = sphi 0, %s106
      %s124 = sphi 0, %s124
      %s126 = sphi 0, %s124
      %s127 = sphi 0, %s126
      %s141 = sphi 0, %s127
      %s145 = sphi 0, %s145
      %s147 = sphi 0, %s145
      %s148 = sphi 0, %s147
      %s162 = sphi 0, %s148
      %s166 = sphi 0, %s166
      %s168 = sphi 0, %s166
      %s169 = sphi 0, %s168
      %s183 = sphi 0, %s169
      %s187 = sphi 0, %s187
      %s189 = sphi 0, %s187
      %s190 = sphi 0, %s189
      %s204 = sphi 0, %s190
      %s208 = sphi 0, %s208
      %s210 = sphi 0, %s208
      %s211 = sphi 0, %s210
      %s225 = sphi 0, %s211
      %s229 = sphi 0, %s229
      %s231 = sphi 0, %s229
      %s232 = sphi 0, %s231
      %s246 = sphi 0, %s232
      %s250 = sphi 0, %s250
      %s252 = sphi 0, %s250
      %s253 = sphi 0, %s252
      %s267 = sphi 0, %s253
      %s271 = sphi 0, %s271
      %s273 = sphi 0, %s271
      %s274 = sphi 0, %s273
      %s288 = sphi 0, %s274
      %s292 = sphi 0, %s292
      %s294 = sphi 0, %s292
      %s295 = sphi 0, %s294
      %s309 = sphi 0, %s295
      %s313 = sphi 0, %s313
      %s315 = sphi 0, %s313
      %s316 = sphi 0, %s315
      %s330 = sphi 0, %s316
      %s334 = sphi 0, %s334
      %s336 = sphi 0, %s334
      %s337 = sphi 0, %s336
      %s351 = sphi 0, %s337
      %s355 = sphi 0, %s355
      %s357 = sphi 0, %s355
      %s358 = sphi 0, %s357
      %s372 = sphi 0, %s358
      %s376 = sphi 0, %s376
      %s378 = sphi 0, %s376
      %s379 = sphi 0, %s378
      %s393 = sphi 0, %s379
      %s397 = sphi 0, %s397
      %s399 = sphi 0, %s397
      %s400 = sphi 0, %s399
      %s414 = sphi 0, %s400
      %s418 = sphi 0, %s418
      %s420 = sphi 0, %s418
      %s421 = sphi 0, %s420
      %s435 = sphi 0, %s421
      %s439 = sphi 0, %s439
      %s441 = sphi 0, %s439
      %s442 = sphi 0, %s441
      %s456 = sphi 0, %s442
      %s464 = sphi 0, %s466
      %s467 = sphi 0, %s464
      %s468 = sphi 0, %s467
      %s484 = sphi 0, %s468
    $region4: #{tpu_custom_call.1} parent=1 // loop_header_branch
      %39 = sbr.rel (%p37) target = $region8
    $region5: #{tpu_custom_call.1} parent=1 // loop_body
      %s41 = ssub.s32 %s36, 1
      %s42 = ssub.s32 %s36, 2
      %s49 = sadd.s32 1, %s44
      %p50 = scmp.ge.s32.totalorder %s49, 1
      %s51 = scalar_select %p50, 0, %s49
      %s52 = sadd.s32 1, %s43
      %s53 = scalar_select %p50, %s52, %s43
      %p54 = scmp.ge.s32.totalorder %s53, 2
      %s55 = scalar_select %p54, 0, %s53
      %s56 = ssub.s32 %s43, %s55
      %p57 = scmp.eq.s32.totalorder %s56, 0
      %s59 = sadd.s32 %s58, 1
      %s60 = scalar_select %p57, %s58, %s59
      %p63 = pneg %p57
      %p64 = scmp.eq.s32.totalorder %s36, 1
      %p65 = por %p63, %p64
      %p66 = scmp.ne.s32.totalorder %s58, %s61
      %p67 = scmp.eq.s32.totalorder %s36, 0
      %p68 = por %p66, %p67
      %p69 = scmp.ne.s32.totalorder %s58, %s61
      %p70 = scmp.eq.s32.totalorder %s41, 1
      %p71 = por %p69, %p70
      %p72 = scmp.ne.s32.totalorder %s61, %s62
      %p73 = scmp.eq.s32.totalorder %s41, 0
      %p74 = por %p72, %p73
      %p75 = scmp.ne.s32.totalorder %s61, %s62
      %p76 = scmp.eq.s32.totalorder %s42, 1
      %p77 = por %p75, %p76
      %p79 = scmp.ne.s32.totalorder %s62, %s78
      %p80 = scmp.eq.s32.totalorder %s42, 0
      %p81 = por %p79, %p80
      %s83 = sadd.s32 %s82, 1
      %p86 = scmp.eq.s32.totalorder %s36, 1
      %p87 = scmp.ne.s32.totalorder %s82, %s84
      %p88 = scmp.eq.s32.totalorder %s36, 0
      %p89 = por %p87, %p88
      %p90 = scmp.ne.s32.totalorder %s82, %s84
      %p91 = scmp.eq.s32.totalorder %s41, 1
      %p92 = por %p90, %p91
      %p93 = scmp.ne.s32.totalorder %s84, %s85
      %p94 = scmp.eq.s32.totalorder %s41, 0
      %p95 = por %p93, %p94
      %p96 = scmp.ne.s32.totalorder %s84, %s85
      %p97 = scmp.eq.s32.totalorder %s42, 1
      %p98 = por %p96, %p97
      %p100 = scmp.ne.s32.totalorder %s85, %s99
      %p101 = scmp.eq.s32.totalorder %s42, 0
      %p102 = por %p100, %p101
      %s104 = sadd.s32 %s103, 1
      %p107 = scmp.eq.s32.totalorder %s36, 1
      %p108 = scmp.ne.s32.totalorder %s103, %s105
      %p109 = scmp.eq.s32.totalorder %s36, 0
      %p110 = por %p108, %p109
      %p111 = scmp.ne.s32.totalorder %s103, %s105
      %p112 = scmp.eq.s32.totalorder %s41, 1
      %p113 = por %p111, %p112
      %p114 = scmp.ne.s32.totalorder %s105, %s106
      %p115 = scmp.eq.s32.totalorder %s41, 0
      %p116 = por %p114, %p115
      %p117 = scmp.ne.s32.totalorder %s105, %s106
      %p118 = scmp.eq.s32.totalorder %s42, 1
      %p119 = por %p117, %p118
      %p121 = scmp.ne.s32.totalorder %s106, %s120
      %p122 = scmp.eq.s32.totalorder %s42, 0
      %p123 = por %p121, %p122
      %s125 = sadd.s32 %s124, 1
      %p128 = scmp.eq.s32.totalorder %s36, 1
      %p129 = scmp.ne.s32.totalorder %s124, %s126
      %p130 = scmp.eq.s32.totalorder %s36, 0
      %p131 = por %p129, %p130
      %p132 = scmp.ne.s32.totalorder %s124, %s126
      %p133 = scmp.eq.s32.totalorder %s41, 1
      %p134 = por %p132, %p133
      %p135 = scmp.ne.s32.totalorder %s126, %s127
      %p136 = scmp.eq.s32.totalorder %s41, 0
      %p137 = por %p135, %p136
      %p138 = scmp.ne.s32.totalorder %s126, %s127
      %p139 = scmp.eq.s32.totalorder %s42, 1
      %p140 = por %p138, %p139
      %p142 = scmp.ne.s32.totalorder %s127, %s141
      %p143 = scmp.eq.s32.totalorder %s42, 0
      %p144 = por %p142, %p143
      %s146 = sadd.s32 %s145, 1
      %p149 = scmp.eq.s32.totalorder %s36, 1
      %p150 = scmp.ne.s32.totalorder %s145, %s147
      %p151 = scmp.eq.s32.totalorder %s36, 0
      %p152 = por %p150, %p151
      %p153 = scmp.ne.s32.totalorder %s145, %s147
      %p154 = scmp.eq.s32.totalorder %s41, 1
      %p155 = por %p153, %p154
      %p156 = scmp.ne.s32.totalorder %s147, %s148
      %p157 = scmp.eq.s32.totalorder %s41, 0
      %p158 = por %p156, %p157
      %p159 = scmp.ne.s32.totalorder %s147, %s148
      %p160 = scmp.eq.s32.totalorder %s42, 1
      %p161 = por %p159, %p160
      %p163 = scmp.ne.s32.totalorder %s148, %s162
      %p164 = scmp.eq.s32.totalorder %s42, 0
      %p165 = por %p163, %p164
      %s167 = sadd.s32 %s166, 1
      %p170 = scmp.eq.s32.totalorder %s36, 1
      %p171 = scmp.ne.s32.totalorder %s166, %s168
      %p172 = scmp.eq.s32.totalorder %s36, 0
      %p173 = por %p171, %p172
      %p174 = scmp.ne.s32.totalorder %s166, %s168
      %p175 = scmp.eq.s32.totalorder %s41, 1
      %p176 = por %p174, %p175
      %p177 = scmp.ne.s32.totalorder %s168, %s169
      %p178 = scmp.eq.s32.totalorder %s41, 0
      %p179 = por %p177, %p178
      %p180 = scmp.ne.s32.totalorder %s168, %s169
      %p181 = scmp.eq.s32.totalorder %s42, 1
      %p182 = por %p180, %p181
      %p184 = scmp.ne.s32.totalorder %s169, %s183
      %p185 = scmp.eq.s32.totalorder %s42, 0
      %p186 = por %p184, %p185
      %s188 = sadd.s32 %s187, 1
      %p191 = scmp.eq.s32.totalorder %s36, 1
      %p192 = scmp.ne.s32.totalorder %s187, %s189
      %p193 = scmp.eq.s32.totalorder %s36, 0
      %p194 = por %p192, %p193
      %p195 = scmp.ne.s32.totalorder %s187, %s189
      %p196 = scmp.eq.s32.totalorder %s41, 1
      %p197 = por %p195, %p196
      %p198 = scmp.ne.s32.totalorder %s189, %s190
      %p199 = scmp.eq.s32.totalorder %s41, 0
      %p200 = por %p198, %p199
      %p201 = scmp.ne.s32.totalorder %s189, %s190
      %p202 = scmp.eq.s32.totalorder %s42, 1
      %p203 = por %p201, %p202
      %p205 = scmp.ne.s32.totalorder %s190, %s204
      %p206 = scmp.eq.s32.totalorder %s42, 0
      %p207 = por %p205, %p206
      %s209 = sadd.s32 %s208, 1
      %p212 = scmp.eq.s32.totalorder %s36, 1
      %p213 = scmp.ne.s32.totalorder %s208, %s210
      %p214 = scmp.eq.s32.totalorder %s36, 0
      %p215 = por %p213, %p214
      %p216 = scmp.ne.s32.totalorder %s208, %s210
      %p217 = scmp.eq.s32.totalorder %s41, 1
      %p218 = por %p216, %p217
      %p219 = scmp.ne.s32.totalorder %s210, %s211
      %p220 = scmp.eq.s32.totalorder %s41, 0
      %p221 = por %p219, %p220
      %p222 = scmp.ne.s32.totalorder %s210, %s211
      %p223 = scmp.eq.s32.totalorder %s42, 1
      %p224 = por %p222, %p223
      %p226 = scmp.ne.s32.totalorder %s211, %s225
      %p227 = scmp.eq.s32.totalorder %s42, 0
      %p228 = por %p226, %p227
      %s230 = sadd.s32 %s229, 1
      %p233 = scmp.eq.s32.totalorder %s36, 1
      %p234 = scmp.ne.s32.totalorder %s229, %s231
      %p235 = scmp.eq.s32.totalorder %s36, 0
      %p236 = por %p234, %p235
      %p237 = scmp.ne.s32.totalorder %s229, %s231
      %p238 = scmp.eq.s32.totalorder %s41, 1
      %p239 = por %p237, %p238
      %p240 = scmp.ne.s32.totalorder %s231, %s232
      %p241 = scmp.eq.s32.totalorder %s41, 0
      %p242 = por %p240, %p241
      %p243 = scmp.ne.s32.totalorder %s231, %s232
      %p244 = scmp.eq.s32.totalorder %s42, 1
      %p245 = por %p243, %p244
      %p247 = scmp.ne.s32.totalorder %s232, %s246
      %p248 = scmp.eq.s32.totalorder %s42, 0
      %p249 = por %p247, %p248
      %s251 = sadd.s32 %s250, 1
      %p254 = scmp.eq.s32.totalorder %s36, 1
      %p255 = scmp.ne.s32.totalorder %s250, %s252
      %p256 = scmp.eq.s32.totalorder %s36, 0
      %p257 = por %p255, %p256
      %p258 = scmp.ne.s32.totalorder %s250, %s252
      %p259 = scmp.eq.s32.totalorder %s41, 1
      %p260 = por %p258, %p259
      %p261 = scmp.ne.s32.totalorder %s252, %s253
      %p262 = scmp.eq.s32.totalorder %s41, 0
      %p263 = por %p261, %p262
      %p264 = scmp.ne.s32.totalorder %s252, %s253
      %p265 = scmp.eq.s32.totalorder %s42, 1
      %p266 = por %p264, %p265
      %p268 = scmp.ne.s32.totalorder %s253, %s267
      %p269 = scmp.eq.s32.totalorder %s42, 0
      %p270 = por %p268, %p269
      %s272 = sadd.s32 %s271, 1
      %p275 = scmp.eq.s32.totalorder %s36, 1
      %p276 = scmp.ne.s32.totalorder %s271, %s273
      %p277 = scmp.eq.s32.totalorder %s36, 0
      %p278 = por %p276, %p277
      %p279 = scmp.ne.s32.totalorder %s271, %s273
      %p280 = scmp.eq.s32.totalorder %s41, 1
      %p281 = por %p279, %p280
      %p282 = scmp.ne.s32.totalorder %s273, %s274
      %p283 = scmp.eq.s32.totalorder %s41, 0
      %p284 = por %p282, %p283
      %p285 = scmp.ne.s32.totalorder %s273, %s274
      %p286 = scmp.eq.s32.totalorder %s42, 1
      %p287 = por %p285, %p286
      %p289 = scmp.ne.s32.totalorder %s274, %s288
      %p290 = scmp.eq.s32.totalorder %s42, 0
      %p291 = por %p289, %p290
      %s293 = sadd.s32 %s292, 1
      %p296 = scmp.eq.s32.totalorder %s36, 1
      %p297 = scmp.ne.s32.totalorder %s292, %s294
      %p298 = scmp.eq.s32.totalorder %s36, 0
      %p299 = por %p297, %p298
      %p300 = scmp.ne.s32.totalorder %s292, %s294
      %p301 = scmp.eq.s32.totalorder %s41, 1
      %p302 = por %p300, %p301
      %p303 = scmp.ne.s32.totalorder %s294, %s295
      %p304 = scmp.eq.s32.totalorder %s41, 0
      %p305 = por %p303, %p304
      %p306 = scmp.ne.s32.totalorder %s294, %s295
      %p307 = scmp.eq.s32.totalorder %s42, 1
      %p308 = por %p306, %p307
      %p310 = scmp.ne.s32.totalorder %s295, %s309
      %p311 = scmp.eq.s32.totalorder %s42, 0
      %p312 = por %p310, %p311
      %s314 = sadd.s32 %s313, 1
      %p317 = scmp.eq.s32.totalorder %s36, 1
      %p318 = scmp.ne.s32.totalorder %s313, %s315
      %p319 = scmp.eq.s32.totalorder %s36, 0
      %p320 = por %p318, %p319
      %p321 = scmp.ne.s32.totalorder %s313, %s315
      %p322 = scmp.eq.s32.totalorder %s41, 1
      %p323 = por %p321, %p322
      %p324 = scmp.ne.s32.totalorder %s315, %s316
      %p325 = scmp.eq.s32.totalorder %s41, 0
      %p326 = por %p324, %p325
      %p327 = scmp.ne.s32.totalorder %s315, %s316
      %p328 = scmp.eq.s32.totalorder %s42, 1
      %p329 = por %p327, %p328
      %p331 = scmp.ne.s32.totalorder %s316, %s330
      %p332 = scmp.eq.s32.totalorder %s42, 0
      %p333 = por %p331, %p332
      %s335 = sadd.s32 %s334, 1
      %p338 = scmp.eq.s32.totalorder %s36, 1
      %p339 = scmp.ne.s32.totalorder %s334, %s336
      %p340 = scmp.eq.s32.totalorder %s36, 0
      %p341 = por %p339, %p340
      %p342 = scmp.ne.s32.totalorder %s334, %s336
      %p343 = scmp.eq.s32.totalorder %s41, 1
      %p344 = por %p342, %p343
      %p345 = scmp.ne.s32.totalorder %s336, %s337
      %p346 = scmp.eq.s32.totalorder %s41, 0
      %p347 = por %p345, %p346
      %p348 = scmp.ne.s32.totalorder %s336, %s337
      %p349 = scmp.eq.s32.totalorder %s42, 1
      %p350 = por %p348, %p349
      %p352 = scmp.ne.s32.totalorder %s337, %s351
      %p353 = scmp.eq.s32.totalorder %s42, 0
      %p354 = por %p352, %p353
      %s356 = sadd.s32 %s355, 1
      %p359 = scmp.eq.s32.totalorder %s36, 1
      %p360 = scmp.ne.s32.totalorder %s355, %s357
      %p361 = scmp.eq.s32.totalorder %s36, 0
      %p362 = por %p360, %p361
      %p363 = scmp.ne.s32.totalorder %s355, %s357
      %p364 = scmp.eq.s32.totalorder %s41, 1
      %p365 = por %p363, %p364
      %p366 = scmp.ne.s32.totalorder %s357, %s358
      %p367 = scmp.eq.s32.totalorder %s41, 0
      %p368 = por %p366, %p367
      %p369 = scmp.ne.s32.totalorder %s357, %s358
      %p370 = scmp.eq.s32.totalorder %s42, 1
      %p371 = por %p369, %p370
      %p373 = scmp.ne.s32.totalorder %s358, %s372
      %p374 = scmp.eq.s32.totalorder %s42, 0
      %p375 = por %p373, %p374
      %s377 = sadd.s32 %s376, 1
      %p380 = scmp.eq.s32.totalorder %s36, 1
      %p381 = scmp.ne.s32.totalorder %s376, %s378
      %p382 = scmp.eq.s32.totalorder %s36, 0
      %p383 = por %p381, %p382
      %p384 = scmp.ne.s32.totalorder %s376, %s378
      %p385 = scmp.eq.s32.totalorder %s41, 1
      %p386 = por %p384, %p385
      %p387 = scmp.ne.s32.totalorder %s378, %s379
      %p388 = scmp.eq.s32.totalorder %s41, 0
      %p389 = por %p387, %p388
      %p390 = scmp.ne.s32.totalorder %s378, %s379
      %p391 = scmp.eq.s32.totalorder %s42, 1
      %p392 = por %p390, %p391
      %p394 = scmp.ne.s32.totalorder %s379, %s393
      %p395 = scmp.eq.s32.totalorder %s42, 0
      %p396 = por %p394, %p395
      %s398 = sadd.s32 %s397, 1
      %p401 = scmp.eq.s32.totalorder %s36, 1
      %p402 = scmp.ne.s32.totalorder %s397, %s399
      %p403 = scmp.eq.s32.totalorder %s36, 0
      %p404 = por %p402, %p403
      %p405 = scmp.ne.s32.totalorder %s397, %s399
      %p406 = scmp.eq.s32.totalorder %s41, 1
      %p407 = por %p405, %p406
      %p408 = scmp.ne.s32.totalorder %s399, %s400
      %p409 = scmp.eq.s32.totalorder %s41, 0
      %p410 = por %p408, %p409
      %p411 = scmp.ne.s32.totalorder %s399, %s400
      %p412 = scmp.eq.s32.totalorder %s42, 1
      %p413 = por %p411, %p412
      %p415 = scmp.ne.s32.totalorder %s400, %s414
      %p416 = scmp.eq.s32.totalorder %s42, 0
      %p417 = por %p415, %p416
      %s419 = sadd.s32 %s418, 1
      %p422 = scmp.eq.s32.totalorder %s36, 1
      %p423 = scmp.ne.s32.totalorder %s418, %s420
      %p424 = scmp.eq.s32.totalorder %s36, 0
      %p425 = por %p423, %p424
      %p426 = scmp.ne.s32.totalorder %s418, %s420
      %p427 = scmp.eq.s32.totalorder %s41, 1
      %p428 = por %p426, %p427
      %p429 = scmp.ne.s32.totalorder %s420, %s421
      %p430 = scmp.eq.s32.totalorder %s41, 0
      %p431 = por %p429, %p430
      %p432 = scmp.ne.s32.totalorder %s420, %s421
      %p433 = scmp.eq.s32.totalorder %s42, 1
      %p434 = por %p432, %p433
      %p436 = scmp.ne.s32.totalorder %s421, %s435
      %p437 = scmp.eq.s32.totalorder %s42, 0
      %p438 = por %p436, %p437
      %s440 = sadd.s32 %s439, 1
      %p443 = scmp.eq.s32.totalorder %s36, 1
      %p444 = scmp.ne.s32.totalorder %s439, %s441
      %p445 = scmp.eq.s32.totalorder %s36, 0
      %p446 = por %p444, %p445
      %p447 = scmp.ne.s32.totalorder %s439, %s441
      %p448 = scmp.eq.s32.totalorder %s41, 1
      %p449 = por %p447, %p448
      %p450 = scmp.ne.s32.totalorder %s441, %s442
      %p451 = scmp.eq.s32.totalorder %s41, 0
      %p452 = por %p450, %p451
      %p453 = scmp.ne.s32.totalorder %s441, %s442
      %p454 = scmp.eq.s32.totalorder %s42, 1
      %p455 = por %p453, %p454
      %p457 = scmp.ne.s32.totalorder %s442, %s456
      %p458 = scmp.eq.s32.totalorder %s42, 0
      %p459 = por %p457, %p458
      %s460 = ssub.s32 %s43, %s55
      %s461 = ssub.s32 %s44, %s51
      %s462 = sor.u32 %s460, %s461
      %p463 = scmp.eq.s32.totalorder %s462, 0
      %s465 = sadd.s32 %s464, 1
      %s466 = scalar_select %p463, %s464, %s465
      %p469 = pneg %p463
      %p470 = scmp.eq.s32.totalorder %s36, 1
      %p471 = por %p469, %p470
      %p472 = scmp.ne.s32.totalorder %s464, %s467
      %p473 = scmp.eq.s32.totalorder %s36, 0
      %p474 = por %p472, %p473
      %p475 = scmp.ne.s32.totalorder %s464, %s467
      %p476 = scmp.eq.s32.totalorder %s41, 1
      %p477 = por %p475, %p476
      %p478 = scmp.ne.s32.totalorder %s467, %s468
      %p479 = scmp.eq.s32.totalorder %s41, 0
      %p480 = por %p478, %p479
      %p481 = scmp.ne.s32.totalorder %s467, %s468
      %p482 = scmp.eq.s32.totalorder %s42, 1
      %p483 = por %p481, %p482
      %p485 = scmp.ne.s32.totalorder %s468, %s484
      %p486 = scmp.eq.s32.totalorder %s42, 0
      %p487 = por %p485, %p486
      %p488 = scmp.le.s32.totalorder 1, %s36
      %p489 = scmp.lt.s32.totalorder %s36, 3
      %p490 = pnand %p488, %p489
      %p491 = pneg %p490
      // Predicated region
      $region9: #{tpu_custom_call.1} parent=5 // pred_check
        _
      $region10: #{tpu_custom_call.1} parent=5 // pred_check_branch
        %493 = sbr.rel (%p490) target = $region12
      $region11: #{tpu_custom_call.1} parent=5 // pred_region
        %s494 = ssub.s32 %s36, 1
        // Predicated region
        $region13: #{tpu_custom_call.1} parent=11 // pred_check
          %p495 = pneg %p95
        $region14: #{tpu_custom_call.1} parent=11 // pred_check_branch
          %497 = sbr.rel (%p495) target = $region16
        $region15: #{tpu_custom_call.1} parent=11 // pred_region
          _
        $region16: #{tpu_custom_call.1} parent=11 // pred_fallthru
          _
        // Predicated region
        $region17: #{tpu_custom_call.1} parent=11 // pred_check
          %p498 = pneg %p116
        $region18: #{tpu_custom_call.1} parent=11 // pred_check_branch
          %500 = sbr.rel (%p498) target = $region20
        $region19: #{tpu_custom_call.1} parent=11 // pred_region
          _
        $region20: #{tpu_custom_call.1} parent=11 // pred_fallthru
          _
        // Predicated region
        $region21: #{tpu_custom_call.1} parent=11 // pred_check
          %p501 = pneg %p137
        $region22: #{tpu_custom_call.1} parent=11 // pred_check_branch
          %503 = sbr.rel (%p501) target = $region24
        $region23: #{tpu_custom_call.1} parent=11 // pred_region
          %505 = vsyncadd [#allocation5], 0
          %s506 = sshll.u32 %s3, 4
          %s507 = int_to_ptr.hbm [resolvable:$true] %s506
          %s508 = sshll.u32 [#allocation4], 4
          %s509 = int_to_ptr.vmem [resolvable:$true] %s508
          %514 = dma.hbm_to_vmem [thread:$0]  %s507, 256, %s509, [#allocation5], 64, 64, 4
        $region24: #{tpu_custom_call.1} parent=11 // pred_fallthru
          _
        // Predicated region
        $region25: #{tpu_custom_call.1} parent=11 // pred_check
          %p515 = pneg %p158
        $region26: #{tpu_custom_call.1} parent=11 // pred_check_branch
          %517 = sbr.rel (%p515) target = $region28
        $region27: #{tpu_custom_call.1} parent=11 // pred_region
          %519 = vsyncadd [#allocation8], 0
          %s520 = sshll.u32 %s4, 4
          %s521 = int_to_ptr.hbm [resolvable:$true] %s520
          %s522 = sshll.u32 [#allocation7], 4
          %s523 = int_to_ptr.vmem [resolvable:$true] %s522
          %528 = dma.hbm_to_vmem [thread:$0]  %s521, 256, %s523, [#allocation8], 64, 64, 4
        $region28: #{tpu_custom_call.1} parent=11 // pred_fallthru
          _
        // Predicated region
        $region29: #{tpu_custom_call.1} parent=11 // pred_check
          %p529 = pneg %p179
        $region30: #{tpu_custom_call.1} parent=11 // pred_check_branch
          %531 = sbr.rel (%p529) target = $region32
        $region31: #{tpu_custom_call.1} parent=11 // pred_region
          %533 = vsyncadd [#allocation8], 0
          %s535 = sshll.u32 %s5, 4
          %s536 = int_to_ptr.hbm [resolvable:$true] %s535
          %s537 = sshll.u32 [#allocation9], 4
          %s538 = int_to_ptr.vmem [resolvable:$true] %s537
          %540 = dma.hbm_to_vmem [thread:$0]  %s536, 16, %s538, [#allocation8]
        $region32: #{tpu_custom_call.1} parent=11 // pred_fallthru
          _
        // Predicated region
        $region33: #{tpu_custom_call.1} parent=11 // pred_check
          %p541 = pneg %p200
        $region34: #{tpu_custom_call.1} parent=11 // pred_check_branch
          %543 = sbr.rel (%p541) target = $region36
        $region35: #{tpu_custom_call.1} parent=11 // pred_region
          %545 = vsyncadd [#allocation11], 0
          %s547 = sshll.u32 %s6, 4
          %s548 = int_to_ptr.hbm [resolvable:$true] %s547
          %s549 = sshll.u32 [#allocation10], 4
          %s550 = int_to_ptr.vmem [resolvable:$true] %s549
          %552 = dma.hbm_to_vmem [thread:$0]  %s548, 16, %s550, [#allocation11]
        $region36: #{tpu_custom_call.1} parent=11 // pred_fallthru
          _
        // Predicated region
        $region37: #{tpu_custom_call.1} parent=11 // pred_check
          %p553 = pneg %p221
        $region38: #{tpu_custom_call.1} parent=11 // pred_check_branch
          %555 = sbr.rel (%p553) target = $region40
        $region39: #{tpu_custom_call.1} parent=11 // pred_region
          %557 = vsyncadd [#allocation11], 0
          %s559 = sshll.u32 %s7, 4
          %s560 = int_to_ptr.hbm [resolvable:$true] %s559
          %s561 = sshll.u32 [#allocation12], 4
          %s562 = int_to_ptr.vmem [resolvable:$true] %s561
          %564 = dma.hbm_to_vmem [thread:$0]  %s560, 16, %s562, [#allocation11]
        $region40: #{tpu_custom_call.1} parent=11 // pred_fallthru
          _
        // Predicated region
        $region41: #{tpu_custom_call.1} parent=11 // pred_check
          %p565 = pneg %p242
        $region42: #{tpu_custom_call.1} parent=11 // pred_check_branch
          %567 = sbr.rel (%p565) target = $region44
        $region43: #{tpu_custom_call.1} parent=11 // pred_region
          %569 = vsyncadd [#allocation14], 0
          %s571 = sshll.u32 %s8, 4
          %s572 = int_to_ptr.hbm [resolvable:$true] %s571
          %s573 = sshll.u32 [#allocation13], 4
          %s574 = int_to_ptr.vmem [resolvable:$true] %s573
          %576 = dma.hbm_to_vmem [thread:$0]  %s572, 16, %s574, [#allocation14]
        $region44: #{tpu_custom_call.1} parent=11 // pred_fallthru
          _
        // Predicated region
        $region45: #{tpu_custom_call.1} parent=11 // pred_check
          %p577 = pneg %p263
        $region46: #{tpu_custom_call.1} parent=11 // pred_check_branch
          %579 = sbr.rel (%p577) target = $region48
        $region47: #{tpu_custom_call.1} parent=11 // pred_region
          %581 = vsyncadd [#allocation14], 0
          %s583 = sshll.u32 %s9, 4
          %s584 = int_to_ptr.hbm [resolvable:$true] %s583
          %s585 = sshll.u32 [#allocation15], 4
          %s586 = int_to_ptr.vmem [resolvable:$true] %s585
          %588 = dma.hbm_to_vmem [thread:$0]  %s584, 16, %s586, [#allocation14]
        $region48: #{tpu_custom_call.1} parent=11 // pred_fallthru
          _
        // Predicated region
        $region49: #{tpu_custom_call.1} parent=11 // pred_check
          %p589 = pneg %p284
        $region50: #{tpu_custom_call.1} parent=11 // pred_check_branch
          %591 = sbr.rel (%p589) target = $region52
        $region51: #{tpu_custom_call.1} parent=11 // pred_region
          %593 = vsyncadd [#allocation17], 0
          %s595 = sshll.u32 %s10, 4
          %s596 = int_to_ptr.hbm [resolvable:$true] %s595
          %s597 = sshll.u32 [#allocation16], 4
          %s598 = int_to_ptr.vmem [resolvable:$true] %s597
          %600 = dma.hbm_to_vmem [thread:$0]  %s596, 16, %s598, [#allocation17]
        $region52: #{tpu_custom_call.1} parent=11 // pred_fallthru
          _
        // Predicated region
        $region53: #{tpu_custom_call.1} parent=11 // pred_check
          %p601 = pneg %p305
        $region54: #{tpu_custom_call.1} parent=11 // pred_check_branch
          %603 = sbr.rel (%p601) target = $region56
        $region55: #{tpu_custom_call.1} parent=11 // pred_region
          %605 = vsyncadd [#allocation17], 0
          %s607 = sshll.u32 %s11, 4
          %s608 = int_to_ptr.hbm [resolvable:$true] %s607
          %s609 = sshll.u32 [#allocation18], 4
          %s610 = int_to_ptr.vmem [resolvable:$true] %s609
          %612 = dma.hbm_to_vmem [thread:$0]  %s608, 16, %s610, [#allocation17]
        $region56: #{tpu_custom_call.1} parent=11 // pred_fallthru
          _
        // Predicated region
        $region57: #{tpu_custom_call.1} parent=11 // pred_check
          %p613 = pneg %p326
        $region58: #{tpu_custom_call.1} parent=11 // pred_check_branch
          %615 = sbr.rel (%p613) target = $region60
        $region59: #{tpu_custom_call.1} parent=11 // pred_region
          %617 = vsyncadd [#allocation20], 0
          %s619 = sshll.u32 %s12, 4
          %s620 = int_to_ptr.hbm [resolvable:$true] %s619
          %s621 = sshll.u32 [#allocation19], 4
          %s622 = int_to_ptr.vmem [resolvable:$true] %s621
          %624 = dma.hbm_to_vmem [thread:$0]  %s620, 16, %s622, [#allocation20]
        $region60: #{tpu_custom_call.1} parent=11 // pred_fallthru
          _
        // Predicated region
        $region61: #{tpu_custom_call.1} parent=11 // pred_check
          %p625 = pneg %p347
        $region62: #{tpu_custom_call.1} parent=11 // pred_check_branch
          %627 = sbr.rel (%p625) target = $region64
        $region63: #{tpu_custom_call.1} parent=11 // pred_region
          %629 = vsyncadd [#allocation20], 0
          %s630 = sshll.u32 %s13, 4
          %s631 = int_to_ptr.hbm [resolvable:$true] %s630
          %s632 = sshll.u32 [#allocation21], 4
          %s633 = int_to_ptr.vmem [resolvable:$true] %s632
          %638 = dma.hbm_to_vmem [thread:$0]  %s631, 256, %s633, [#allocation20], 64, 64, 4
        $region64: #{tpu_custom_call.1} parent=11 // pred_fallthru
          _
        // Predicated region
        $region65: #{tpu_custom_call.1} parent=11 // pred_check
          %p639 = pneg %p368
        $region66: #{tpu_custom_call.1} parent=11 // pred_check_branch
          %641 = sbr.rel (%p639) target = $region68
        $region67: #{tpu_custom_call.1} parent=11 // pred_region
          %643 = vsyncadd [#allocation23], 0
          %s645 = sshll.u32 %s14, 4
          %s646 = int_to_ptr.hbm [resolvable:$true] %s645
          %s647 = sshll.u32 [#allocation22], 4
          %s648 = int_to_ptr.vmem [resolvable:$true] %s647
          %650 = dma.hbm_to_vmem [thread:$0]  %s646, 16, %s648, [#allocation23]
        $region68: #{tpu_custom_call.1} parent=11 // pred_fallthru
          _
        // Predicated region
        $region69: #{tpu_custom_call.1} parent=11 // pred_check
          %p651 = pneg %p389
        $region70: #{tpu_custom_call.1} parent=11 // pred_check_branch
          %653 = sbr.rel (%p651) target = $region72
        $region71: #{tpu_custom_call.1} parent=11 // pred_region
          %655 = vsyncadd [#allocation23], 0
          %s657 = sshll.u32 %s15, 4
          %s658 = int_to_ptr.hbm [resolvable:$true] %s657
          %s659 = sshll.u32 [#allocation24], 4
          %s660 = int_to_ptr.vmem [resolvable:$true] %s659
          %662 = dma.hbm_to_vmem [thread:$0]  %s658, 16, %s660, [#allocation23]
        $region72: #{tpu_custom_call.1} parent=11 // pred_fallthru
          _
        // Predicated region
        $region73: #{tpu_custom_call.1} parent=11 // pred_check
          %p663 = pneg %p410
        $region74: #{tpu_custom_call.1} parent=11 // pred_check_branch
          %665 = sbr.rel (%p663) target = $region76
        $region75: #{tpu_custom_call.1} parent=11 // pred_region
          %667 = vsyncadd [#allocation26], 0
          %s669 = sshll.u32 %s16, 4
          %s670 = int_to_ptr.hbm [resolvable:$true] %s669
          %s671 = sshll.u32 [#allocation25], 4
          %s672 = int_to_ptr.vmem [resolvable:$true] %s671
          %674 = dma.hbm_to_vmem [thread:$0]  %s670, 16, %s672, [#allocation26]
        $region76: #{tpu_custom_call.1} parent=11 // pred_fallthru
          _
        // Predicated region
        $region77: #{tpu_custom_call.1} parent=11 // pred_check
          %p675 = pneg %p431
        $region78: #{tpu_custom_call.1} parent=11 // pred_check_branch
          %677 = sbr.rel (%p675) target = $region80
        $region79: #{tpu_custom_call.1} parent=11 // pred_region
          _
        $region80: #{tpu_custom_call.1} parent=11 // pred_fallthru
          _
        // Predicated region
        $region81: #{tpu_custom_call.1} parent=11 // pred_check
          %p678 = pneg %p452
        $region82: #{tpu_custom_call.1} parent=11 // pred_check_branch
          %680 = sbr.rel (%p678) target = $region84
        $region83: #{tpu_custom_call.1} parent=11 // pred_region
          _
        $region84: #{tpu_custom_call.1} parent=11 // pred_fallthru
          _
      $region12: #{tpu_custom_call.1} parent=5 // pred_fallthru
        _
      %p681 = scmp.lt.s32.totalorder %s36, 2
      // Predicated region
      $region85: #{tpu_custom_call.1} parent=5 // pred_check
        %p682 = pneg %p681
      $region86: #{tpu_custom_call.1} parent=5 // pred_check_branch
        %684 = sbr.rel (%p682) target = $region88
      $region87: #{tpu_custom_call.1} parent=5 // pred_region
        // Predicated region
        $region89: #{tpu_custom_call.1} parent=87 // pred_check
          %p685 = pneg %p68
        $region90: #{tpu_custom_call.1} parent=87 // pred_check_branch
          %687 = sbr.rel (%p685) target = $region92
        $region91: #{tpu_custom_call.1} parent=87 // pred_region
          %p688 = scmp.lt.s32.totalorder %s43, 1
          %s689 = scalar_select %p688, %s43, 1
          %s690 = smul.addr %s689, 8
          %s691 = scalar_lea.vmem %s0, %s690
        $region92: #{tpu_custom_call.1} parent=87 // pred_fallthru
          _
      $region88: #{tpu_custom_call.1} parent=5 // pred_fallthru
        _
      %p692 = scmp.le.s32.totalorder 1, %s36
      %p693 = scmp.lt.s32.totalorder %s36, 3
      %p694 = pnand %p692, %p693
      %p695 = pneg %p694
      // Predicated region
      $region93: #{tpu_custom_call.1} parent=5 // pred_check
        _
      $region94: #{tpu_custom_call.1} parent=5 // pred_check_branch
        %697 = sbr.rel (%p694) target = $region96
      $region95: #{tpu_custom_call.1} parent=5 // pred_region
        %s698 = ssub.s32 %s36, 1
        // Predicated region
        $region97: #{tpu_custom_call.1} parent=95 // pred_check
          %p699 = pneg %p137
        $region98: #{tpu_custom_call.1} parent=95 // pred_check_branch
          %701 = sbr.rel (%p699) target = $region100
        $region99: #{tpu_custom_call.1} parent=95 // pred_region
          %703 = dma.done [#allocation5], 256
        $region100: #{tpu_custom_call.1} parent=95 // pred_fallthru
          _
        // Predicated region
        $region101: #{tpu_custom_call.1} parent=95 // pred_check
          %p704 = pneg %p158
        $region102: #{tpu_custom_call.1} parent=95 // pred_check_branch
          %706 = sbr.rel (%p704) target = $region104
        $region103: #{tpu_custom_call.1} parent=95 // pred_region
          %708 = dma.done [#allocation8], 256
        $region104: #{tpu_custom_call.1} parent=95 // pred_fallthru
          _
        // Predicated region
        $region105: #{tpu_custom_call.1} parent=95 // pred_check
          %p709 = pneg %p179
        $region106: #{tpu_custom_call.1} parent=95 // pred_check_branch
          %711 = sbr.rel (%p709) target = $region108
        $region107: #{tpu_custom_call.1} parent=95 // pred_region
          %713 = dma.done [#allocation8], 16
        $region108: #{tpu_custom_call.1} parent=95 // pred_fallthru
          _
        // Predicated region
        $region109: #{tpu_custom_call.1} parent=95 // pred_check
          %p714 = pneg %p200
        $region110: #{tpu_custom_call.1} parent=95 // pred_check_branch
          %716 = sbr.rel (%p714) target = $region112
        $region111: #{tpu_custom_call.1} parent=95 // pred_region
          %718 = dma.done [#allocation11], 16
        $region112: #{tpu_custom_call.1} parent=95 // pred_fallthru
          _
        // Predicated region
        $region113: #{tpu_custom_call.1} parent=95 // pred_check
          %p719 = pneg %p221
        $region114: #{tpu_custom_call.1} parent=95 // pred_check_branch
          %721 = sbr.rel (%p719) target = $region116
        $region115: #{tpu_custom_call.1} parent=95 // pred_region
          %723 = dma.done [#allocation11], 16
        $region116: #{tpu_custom_call.1} parent=95 // pred_fallthru
          _
        // Predicated region
        $region117: #{tpu_custom_call.1} parent=95 // pred_check
          %p724 = pneg %p242
        $region118: #{tpu_custom_call.1} parent=95 // pred_check_branch
          %726 = sbr.rel (%p724) target = $region120
        $region119: #{tpu_custom_call.1} parent=95 // pred_region
          %728 = dma.done [#allocation14], 16
        $region120: #{tpu_custom_call.1} parent=95 // pred_fallthru
          _
        // Predicated region
        $region121: #{tpu_custom_call.1} parent=95 // pred_check
          %p729 = pneg %p263
        $region122: #{tpu_custom_call.1} parent=95 // pred_check_branch
          %731 = sbr.rel (%p729) target = $region124
        $region123: #{tpu_custom_call.1} parent=95 // pred_region
          %733 = dma.done [#allocation14], 16
        $region124: #{tpu_custom_call.1} parent=95 // pred_fallthru
          _
        // Predicated region
        $region125: #{tpu_custom_call.1} parent=95 // pred_check
          %p734 = pneg %p284
        $region126: #{tpu_custom_call.1} parent=95 // pred_check_branch
          %736 = sbr.rel (%p734) target = $region128
        $region127: #{tpu_custom_call.1} parent=95 // pred_region
          %738 = dma.done [#allocation17], 16
        $region128: #{tpu_custom_call.1} parent=95 // pred_fallthru
          _
        // Predicated region
        $region129: #{tpu_custom_call.1} parent=95 // pred_check
          %p739 = pneg %p305
        $region130: #{tpu_custom_call.1} parent=95 // pred_check_branch
          %741 = sbr.rel (%p739) target = $region132
        $region131: #{tpu_custom_call.1} parent=95 // pred_region
          %743 = dma.done [#allocation17], 16
        $region132: #{tpu_custom_call.1} parent=95 // pred_fallthru
          _
        // Predicated region
        $region133: #{tpu_custom_call.1} parent=95 // pred_check
          %p744 = pneg %p326
        $region134: #{tpu_custom_call.1} parent=95 // pred_check_branch
          %746 = sbr.rel (%p744) target = $region136
        $region135: #{tpu_custom_call.1} parent=95 // pred_region
          %748 = dma.done [#allocation20], 16
        $region136: #{tpu_custom_call.1} parent=95 // pred_fallthru
          _
        // Predicated region
        $region137: #{tpu_custom_call.1} parent=95 // pred_check
          %p749 = pneg %p347
        $region138: #{tpu_custom_call.1} parent=95 // pred_check_branch
          %751 = sbr.rel (%p749) target = $region140
        $region139: #{tpu_custom_call.1} parent=95 // pred_region
          %753 = dma.done [#allocation20], 256
        $region140: #{tpu_custom_call.1} parent=95 // pred_fallthru
          _
        // Predicated region
        $region141: #{tpu_custom_call.1} parent=95 // pred_check
          %p754 = pneg %p368
        $region142: #{tpu_custom_call.1} parent=95 // pred_check_branch
          %756 = sbr.rel (%p754) target = $region144
        $region143: #{tpu_custom_call.1} parent=95 // pred_region
          %758 = dma.done [#allocation23], 16
        $region144: #{tpu_custom_call.1} parent=95 // pred_fallthru
          _
        // Predicated region
        $region145: #{tpu_custom_call.1} parent=95 // pred_check
          %p759 = pneg %p389
        $region146: #{tpu_custom_call.1} parent=95 // pred_check_branch
          %761 = sbr.rel (%p759) target = $region148
        $region147: #{tpu_custom_call.1} parent=95 // pred_region
          %763 = dma.done [#allocation23], 16
        $region148: #{tpu_custom_call.1} parent=95 // pred_fallthru
          _
        // Predicated region
        $region149: #{tpu_custom_call.1} parent=95 // pred_check
          %p764 = pneg %p410
        $region150: #{tpu_custom_call.1} parent=95 // pred_check_branch
          %766 = sbr.rel (%p764) target = $region152
        $region151: #{tpu_custom_call.1} parent=95 // pred_region
          %768 = dma.done [#allocation26], 16
        $region152: #{tpu_custom_call.1} parent=95 // pred_fallthru
          _
        %p769 = scmp.lt.s32.totalorder %s45, 1
        %s770 = scalar_select %p769, %s45, 1
        %s771 = smul.addr %s770, 8
        %s772 = scalar_lea.vmem %s0, %s771
        %p773 = pneg %p74
        %p774 = pneg %p71
        %p775 = pneg %p95
        %p776 = pneg %p92
        %p777 = pneg %p116
        %p778 = pneg %p113
        %p779 = pneg %p137
        %p780 = pneg %p134
        %p781 = pneg %p158
        %p782 = pneg %p155
        %p783 = pneg %p179
        %p784 = pneg %p176
        %p785 = pneg %p200
        %p786 = pneg %p197
        %p787 = pneg %p221
        %p788 = pneg %p218
        %p789 = pneg %p242
        %p790 = pneg %p239
        %p791 = pneg %p263
        %p792 = pneg %p260
        %p793 = pneg %p284
        %p794 = pneg %p281
        %p795 = pneg %p305
        %p796 = pneg %p302
        %p797 = pneg %p326
        %p798 = pneg %p323
        %p799 = pneg %p347
        %p800 = pneg %p344
        %p801 = pneg %p368
        %p802 = pneg %p365
        %p803 = pneg %p389
        %p804 = pneg %p386
        %p805 = pneg %p410
        %p806 = pneg %p407
        %p807 = pneg %p431
        %p808 = pneg %p428
        %p809 = pneg %p452
        %p810 = pneg %p449
        %p811 = pneg %p480
        %p812 = pneg %p477
        %s813 = sand.u32 %s467, 1
        %s814 = scalar_lea.sflag [#allocation6], %s813
        %s815 = sand.u32 %s467, 1
        %s816 = smul.addr %s815, 8
        %s817 = scalar_lea.vmem [#allocation27], %s816
        %p818 = scmp.lt.s32.totalorder %s45, 1
        %s819 = scalar_select %p818, %s45, 1
        %s820 = smul.addr %s819, 8
        %s821 = scalar_lea.vmem %s0, %s820
        %p823 = scmp.eq.s32.totalorder %s46, 0
        // Predicated region
        $region153: #{tpu_custom_call.1} parent=95 // pred_check
          %p824 = pneg %p823
        $region154: #{tpu_custom_call.1} parent=95 // pred_check_branch
          %826 = sbr.rel (%p824) target = $region156
        $region155: #{tpu_custom_call.1} parent=95 // pred_region
          %v827 = vld [vmem:[%s821] sm:$0xff]
          %v828 = vpack.c.bf16 %v827, %v827
          %v829 = vld [vmem:[%s2] sm:$0xf]
          %v830 = vld [vmem:[%s2 + $0x4] sm:$0xf]
          %v831 = vld [vmem:[%s2 + $0x8] sm:$0xf]
          %v832 = vld [vmem:[%s2 + $0xc] sm:$0xf]
          %v833 = vld [vmem:[#allocation10] sm:$0x1]
          %v835 = vperm.slane %v833, 0
          %v841 = vunpack.c.l.b16 %v829
          %v842 = vunpack.c.l.b16 %v830
          %v843 = vunpack.c.l.b16 %v831
          %v844 = vunpack.c.l.b16 %v832
          %v845 = vpack.c.b16 %v842, %v841
          %v846 = vpack.c.b16 %v844, %v843
          %vm849 = vcmask 261120
          %v851 = vsel %vm849, %v828, 0
          %853 = vmatpush.bf16.msra.mxu0 0
          %854 = vmatpush.bf16.msra.mxu0 0
          %855 = vmatpush.bf16.msra.mxu0 0
          %856 = vmatpush.bf16.msra.mxu0 0
          %857 = vmatpush.bf16.msra.mxu0 0
          %858 = vmatpush.bf16.msra.mxu0 0
          %859 = vmatpush.bf16.msra.mxu0 %v846
          %860 = vmatpush.bf16.msra.mxu0 %v845
          %861 = vmatmul.bf16.gmra.mxu0 %v851
          %v862 = vpop.f32.mrf.mxu0
          %v863 = vadd.f32 %v835, %v862
          %v864 = vpop.f32.mrf.mxu0
          %865 = vdwg.mxu0
          %v866 = vld [vmem:[#allocation4] sm:$0xf]
          %v867 = vld [vmem:[#allocation4 + $0x4] sm:$0xf]
          %v868 = vld [vmem:[#allocation4 + $0x8] sm:$0xf]
          %v869 = vld [vmem:[#allocation4 + $0xc] sm:$0xf]
          %v870 = vld [vmem:[#allocation12] sm:$0x1]
          %v872 = vperm.slane %v870, 0
          %v878 = vunpack.c.l.b16 %v866
          %v879 = vunpack.c.l.b16 %v867
          %v880 = vunpack.c.l.b16 %v868
          %v881 = vunpack.c.l.b16 %v869
          %v882 = vpack.c.b16 %v879, %v878
          %v883 = vpack.c.b16 %v881, %v880
          %886 = vmatpush.bf16.msra.mxu0 0
          %887 = vmatpush.bf16.msra.mxu0 0
          %888 = vmatpush.bf16.msra.mxu0 0
          %889 = vmatpush.bf16.msra.mxu0 0
          %890 = vmatpush.bf16.msra.mxu0 0
          %891 = vmatpush.bf16.msra.mxu0 0
          %892 = vmatpush.bf16.msra.mxu0 %v883
          %893 = vmatpush.bf16.msra.mxu0 %v882
          %894 = vmatmul.bf16.gmra.mxu0 %v851
          %v895 = vpop.f32.mrf.mxu0
          %v896 = vadd.f32 %v872, %v895
          %v897 = vpop.f32.mrf.mxu0
          %898 = vdwg.mxu0
          %900 = vrot.lane.b32.xlu0 %v863, 120
          %v901 = vpop.permute.xlu0 %900
          %903 = vrot.lane.b32.xlu0 %v863, 112
          %v904 = vpop.permute.xlu0 %903
          %906 = vrot.lane.b32.xlu0 %v863, 104
          %v907 = vpop.permute.xlu0 %906
          %v909 = vrot.slane %v904, 4
          %vm910 = vcmask 1047556
          %v911 = vsel %vm910, %v909, %v863
          %v912 = vrot.slane %v863, 4
          %v913 = vsel %vm910, %v904, %v912
          %v915 = vunpack.c.l.s4 1983009808
          %v916 = vunpack.c.0.s8 %v915
          %v917 = vperm.slane %v911, %v916
          %v919 = vunpack.c.l.s4 1983009808
          %v920 = vunpack.c.0.s8 %v919
          %v921 = vperm.slane %v913, %v920
          %v922 = vrot.slane %v907, 4
          %v923 = vsel %vm910, %v922, %v901
          %v924 = vrot.slane %v901, 4
          %v925 = vsel %vm910, %v907, %v924
          %v927 = vunpack.c.l.s4 1983009808
          %v928 = vunpack.c.0.s8 %v927
          %v929 = vperm.slane %v923, %v928
          %v931 = vunpack.c.l.s4 1983009808
          %v932 = vunpack.c.0.s8 %v931
          %v933 = vperm.slane %v925, %v932
          %v934 = vrot.slane %v929, 4
          %v935 = vsel %vm910, %v934, %v917
          %v936 = vrot.slane %v917, 4
          %v937 = vsel %vm910, %v929, %v936
          %v939 = vunpack.c.l.s4 1934713408
          %v940 = vunpack.c.0.s8 %v939
          %v941 = vperm.slane %v935, %v940
          %v943 = vunpack.c.l.s4 1934713408
          %v944 = vunpack.c.0.s8 %v943
          %v945 = vperm.slane %v937, %v944
          %v946 = vrot.slane %v933, 4
          %v947 = vsel %vm910, %v946, %v921
          %v948 = vrot.slane %v921, 4
          %v949 = vsel %vm910, %v933, %v948
          %v951 = vunpack.c.l.s4 1934713408
          %v952 = vunpack.c.0.s8 %v951
          %v953 = vperm.slane %v947, %v952
          %v955 = vunpack.c.l.s4 1934713408
          %v956 = vunpack.c.0.s8 %v955
          %v957 = vperm.slane %v949, %v956
          %v958 = vrot.slane %v941, 4
          %v959 = vsel %vm910, 0.0, %v958
          %v960 = vrot.slane %v945, 4
          %v961 = vsel %vm910, 0.0, %v960
          %v962 = vrot.slane %v953, 4
          %v963 = vsel %vm910, 0.0, %v962
          %v964 = vrot.slane %v957, 4
          %v965 = vsel %vm910, 0.0, %v964
          %v966 = vsel %vm910, %v960, %v941
          %v968 = vunpack.c.l.s4 1983009808
          %v969 = vunpack.c.0.s8 %v968
          %v970 = vperm.slane %v966, %v969
          %v971 = vrot.slane %v961, 4
          %v972 = vsel %vm910, %v971, %v959
          %v974 = vunpack.c.l.s4 1983009808
          %v975 = vunpack.c.0.s8 %v974
          %v976 = vperm.slane %v972, %v975
          %v977 = vsel %vm910, %v964, %v953
          %v979 = vunpack.c.l.s4 1983009808
          %v980 = vunpack.c.0.s8 %v979
          %v981 = vperm.slane %v977, %v980
          %v982 = vrot.slane %v965, 4
          %v983 = vsel %vm910, %v982, %v963
          %v985 = vunpack.c.l.s4 1983009808
          %v986 = vunpack.c.0.s8 %v985
          %v987 = vperm.slane %v983, %v986
          %v988 = vrot.slane %v976, 4
          %v989 = vsel %vm910, %v988, %v970
          %v990 = vrot.slane %v970, 4
          %v991 = vsel %vm910, %v976, %v990
          %v993 = vunpack.c.l.s4 1934713408
          %v994 = vunpack.c.0.s8 %v993
          %v995 = vperm.slane %v989, %v994
          %v997 = vunpack.c.l.s4 1934713408
          %v998 = vunpack.c.0.s8 %v997
          %v999 = vperm.slane %v991, %v998
          %v1000 = vrot.slane %v987, 4
          %v1001 = vsel %vm910, %v1000, %v981
          %v1002 = vrot.slane %v981, 4
          %v1003 = vsel %vm910, %v987, %v1002
          %v1005 = vunpack.c.l.s4 1934713408
          %v1006 = vunpack.c.0.s8 %v1005
          %v1007 = vperm.slane %v1001, %v1006
          %v1009 = vunpack.c.l.s4 1934713408
          %v1010 = vunpack.c.0.s8 %v1009
          %v1011 = vperm.slane %v1003, %v1010
          %v1012 = vrot.slane %v1007, 4
          %v1013 = vsel %vm910, %v1012, %v995
          %v1014 = vrot.slane %v995, 4
          %v1015 = vsel %vm910, %v1007, %v1014
          %v1016 = vrot.slane %v1011, 4
          %v1017 = vsel %vm910, %v1016, %v999
          %v1018 = vrot.slane %v999, 4
          %v1019 = vsel %vm910, %v1011, %v1018
          %1020 = vxpose.xlu0.b32.start [1/16] %v1013, 128
          %1021 = vxpose.xlu0.b32.cont [2/16] 0.0, 128
          %1022 = vxpose.xlu0.b32.cont [3/16] 0.0, 128
          %1023 = vxpose.xlu0.b32.cont [4/16] 0.0, 128
          %1024 = vxpose.xlu0.b32.cont [5/16] 0.0, 128
          %1025 = vxpose.xlu0.b32.cont [6/16] 0.0, 128
          %1026 = vxpose.xlu0.b32.cont [7/16] 0.0, 128
          %1027 = vxpose.xlu0.b32.cont [8/16] 0.0, 128
          %1028 = vxpose.xlu0.b32.cont [9/16] 0.0, 128
          %1029 = vxpose.xlu0.b32.cont [10/16] 0.0, 128
          %1030 = vxpose.xlu0.b32.cont [11/16] 0.0, 128
          %1031 = vxpose.xlu0.b32.cont [12/16] 0.0, 128
          %1032 = vxpose.xlu0.b32.cont [13/16] 0.0, 128
          %1033 = vxpose.xlu0.b32.cont [14/16] 0.0, 128
          %1034 = vxpose.xlu0.b32.cont [15/16] 0.0, 128
          %1035 = vxpose.xlu0.b32.end [16/16] 0.0, 128
          %v1036 = vpop.trf.xlu0
          %v1037 = vpop.trf.xlu0
          %v1038 = vpop.trf.xlu0
          %v1039 = vpop.trf.xlu0
          %v1040 = vpop.trf.xlu0
          %v1041 = vpop.trf.xlu0
          %v1042 = vpop.trf.xlu0
          %v1043 = vpop.trf.xlu0
          %v1044 = vpop.trf.xlu0
          %v1045 = vpop.trf.xlu0
          %v1046 = vpop.trf.xlu0
          %v1047 = vpop.trf.xlu0
          %v1048 = vpop.trf.xlu0
          %v1049 = vpop.trf.xlu0
          %v1050 = vpop.trf.xlu0
          %v1051 = vpop.trf.xlu0
          %1052 = vxpose.xlu0.b32.start [1/16] %v1015, 128
          %1053 = vxpose.xlu0.b32.cont [2/16] 0.0, 128
          %1054 = vxpose.xlu0.b32.cont [3/16] 0.0, 128
          %1055 = vxpose.xlu0.b32.cont [4/16] 0.0, 128
          %1056 = vxpose.xlu0.b32.cont [5/16] 0.0, 128
          %1057 = vxpose.xlu0.b32.cont [6/16] 0.0, 128
          %1058 = vxpose.xlu0.b32.cont [7/16] 0.0, 128
          %1059 = vxpose.xlu0.b32.cont [8/16] 0.0, 128
          %1060 = vxpose.xlu0.b32.cont [9/16] 0.0, 128
          %1061 = vxpose.xlu0.b32.cont [10/16] 0.0, 128
          %1062 = vxpose.xlu0.b32.cont [11/16] 0.0, 128
          %1063 = vxpose.xlu0.b32.cont [12/16] 0.0, 128
          %1064 = vxpose.xlu0.b32.cont [13/16] 0.0, 128
          %1065 = vxpose.xlu0.b32.cont [14/16] 0.0, 128
          %1066 = vxpose.xlu0.b32.cont [15/16] 0.0, 128
          %1067 = vxpose.xlu0.b32.end [16/16] 0.0, 128
          %v1068 = vpop.trf.xlu0
          %v1069 = vpop.trf.xlu0
          %v1070 = vpop.trf.xlu0
          %v1071 = vpop.trf.xlu0
          %v1072 = vpop.trf.xlu0
          %v1073 = vpop.trf.xlu0
          %v1074 = vpop.trf.xlu0
          %v1075 = vpop.trf.xlu0
          %v1076 = vpop.trf.xlu0
          %v1077 = vpop.trf.xlu0
          %v1078 = vpop.trf.xlu0
          %v1079 = vpop.trf.xlu0
          %v1080 = vpop.trf.xlu0
          %v1081 = vpop.trf.xlu0
          %v1082 = vpop.trf.xlu0
          %v1083 = vpop.trf.xlu0
          %1084 = vxpose.xlu0.b32.start [1/16] %v1017, 128
          %1085 = vxpose.xlu0.b32.cont [2/16] 0.0, 128
          %1086 = vxpose.xlu0.b32.cont [3/16] 0.0, 128
          %1087 = vxpose.xlu0.b32.cont [4/16] 0.0, 128
          %1088 = vxpose.xlu0.b32.cont [5/16] 0.0, 128
          %1089 = vxpose.xlu0.b32.cont [6/16] 0.0, 128
          %1090 = vxpose.xlu0.b32.cont [7/16] 0.0, 128
          %1091 = vxpose.xlu0.b32.cont [8/16] 0.0, 128
          %1092 = vxpose.xlu0.b32.cont [9/16] 0.0, 128
          %1093 = vxpose.xlu0.b32.cont [10/16] 0.0, 128
          %1094 = vxpose.xlu0.b32.cont [11/16] 0.0, 128
          %1095 = vxpose.xlu0.b32.cont [12/16] 0.0, 128
          %1096 = vxpose.xlu0.b32.cont [13/16] 0.0, 128
          %1097 = vxpose.xlu0.b32.cont [14/16] 0.0, 128
          %1098 = vxpose.xlu0.b32.cont [15/16] 0.0, 128
          %1099 = vxpose.xlu0.b32.end [16/16] 0.0, 128
          %v1100 = vpop.trf.xlu0
          %v1101 = vpop.trf.xlu0
          %v1102 = vpop.trf.xlu0
          %v1103 = vpop.trf.xlu0
          %v1104 = vpop.trf.xlu0
          %v1105 = vpop.trf.xlu0
          %v1106 = vpop.trf.xlu0
          %v1107 = vpop.trf.xlu0
          %v1108 = vpop.trf.xlu0
          %v1109 = vpop.trf.xlu0
          %v1110 = vpop.trf.xlu0
          %v1111 = vpop.trf.xlu0
          %v1112 = vpop.trf.xlu0
          %v1113 = vpop.trf.xlu0
          %v1114 = vpop.trf.xlu0
          %v1115 = vpop.trf.xlu0
          %1116 = vxpose.xlu0.b32.start [1/16] %v1019, 128
          %1117 = vxpose.xlu0.b32.cont [2/16] 0.0, 128
          %1118 = vxpose.xlu0.b32.cont [3/16] 0.0, 128
          %1119 = vxpose.xlu0.b32.cont [4/16] 0.0, 128
          %1120 = vxpose.xlu0.b32.cont [5/16] 0.0, 128
          %1121 = vxpose.xlu0.b32.cont [6/16] 0.0, 128
          %1122 = vxpose.xlu0.b32.cont [7/16] 0.0, 128
          %1123 = vxpose.xlu0.b32.cont [8/16] 0.0, 128
          %1124 = vxpose.xlu0.b32.cont [9/16] 0.0, 128
          %1125 = vxpose.xlu0.b32.cont [10/16] 0.0, 128
          %1126 = vxpose.xlu0.b32.cont [11/16] 0.0, 128
          %1127 = vxpose.xlu0.b32.cont [12/16] 0.0, 128
          %1128 = vxpose.xlu0.b32.cont [13/16] 0.0, 128
          %1129 = vxpose.xlu0.b32.cont [14/16] 0.0, 128
          %1130 = vxpose.xlu0.b32.cont [15/16] 0.0, 128
          %1131 = vxpose.xlu0.b32.end [16/16] 0.0, 128
          %v1132 = vpop.trf.xlu0
          %v1133 = vpop.trf.xlu0
          %v1134 = vpop.trf.xlu0
          %v1135 = vpop.trf.xlu0
          %v1136 = vpop.trf.xlu0
          %v1137 = vpop.trf.xlu0
          %v1138 = vpop.trf.xlu0
          %v1139 = vpop.trf.xlu0
          %v1140 = vpop.trf.xlu0
          %v1141 = vpop.trf.xlu0
          %v1142 = vpop.trf.xlu0
          %v1143 = vpop.trf.xlu0
          %v1144 = vpop.trf.xlu0
          %v1145 = vpop.trf.xlu0
          %v1146 = vpop.trf.xlu0
          %v1147 = vpop.trf.xlu0
          %v1148 = vpack.c.bf16 %v1036, %v1036
          %v1149 = vpack.c.bf16 %v1068, %v1068
          %v1150 = vpack.c.bf16 %v1100, %v1100
          %v1151 = vpack.c.bf16 %v1132, %v1132
          %vm1152 = vcmask 60416
          %1153 = vst.msk [vmem:[#allocation2] sm:$0xf] %vm1152, %v1148
          %1154 = vst.msk [vmem:[#allocation2 + $0x4] sm:$0xf] %vm1152, %v1149
          %1155 = vst.msk [vmem:[#allocation2 + $0x8] sm:$0xf] %vm1152, %v1150
          %1156 = vst.msk [vmem:[#allocation2 + $0xc] sm:$0xf] %vm1152, %v1151
          %1158 = vrot.lane.b32.xlu0 %v896, 120
          %v1159 = vpop.permute.xlu0 %1158
          %1161 = vrot.lane.b32.xlu0 %v896, 112
          %v1162 = vpop.permute.xlu0 %1161
          %1164 = vrot.lane.b32.xlu0 %v896, 104
          %v1165 = vpop.permute.xlu0 %1164
          %v1167 = vrot.slane %v1162, 4
          %v1168 = vsel %vm910, %v1167, %v896
          %v1169 = vrot.slane %v896, 4
          %v1170 = vsel %vm910, %v1162, %v1169
          %v1172 = vunpack.c.l.s4 1983009808
          %v1173 = vunpack.c.0.s8 %v1172
          %v1174 = vperm.slane %v1168, %v1173
          %v1176 = vunpack.c.l.s4 1983009808
          %v1177 = vunpack.c.0.s8 %v1176
          %v1178 = vperm.slane %v1170, %v1177
          %v1179 = vrot.slane %v1165, 4
          %v1180 = vsel %vm910, %v1179, %v1159
          %v1181 = vrot.slane %v1159, 4
          %v1182 = vsel %vm910, %v1165, %v1181
          %v1184 = vunpack.c.l.s4 1983009808
          %v1185 = vunpack.c.0.s8 %v1184
          %v1186 = vperm.slane %v1180, %v1185
          %v1188 = vunpack.c.l.s4 1983009808
          %v1189 = vunpack.c.0.s8 %v1188
          %v1190 = vperm.slane %v1182, %v1189
          %v1191 = vrot.slane %v1186, 4
          %v1192 = vsel %vm910, %v1191, %v1174
          %v1193 = vrot.slane %v1174, 4
          %v1194 = vsel %vm910, %v1186, %v1193
          %v1196 = vunpack.c.l.s4 1934713408
          %v1197 = vunpack.c.0.s8 %v1196
          %v1198 = vperm.slane %v1192, %v1197
          %v1200 = vunpack.c.l.s4 1934713408
          %v1201 = vunpack.c.0.s8 %v1200
          %v1202 = vperm.slane %v1194, %v1201
          %v1203 = vrot.slane %v1190, 4
          %v1204 = vsel %vm910, %v1203, %v1178
          %v1205 = vrot.slane %v1178, 4
          %v1206 = vsel %vm910, %v1190, %v1205
          %v1208 = vunpack.c.l.s4 1934713408
          %v1209 = vunpack.c.0.s8 %v1208
          %v1210 = vperm.slane %v1204, %v1209
          %v1212 = vunpack.c.l.s4 1934713408
          %v1213 = vunpack.c.0.s8 %v1212
          %v1214 = vperm.slane %v1206, %v1213
          %v1215 = vrot.slane %v1198, 4
          %v1216 = vsel %vm910, 0.0, %v1215
          %v1217 = vrot.slane %v1202, 4
          %v1218 = vsel %vm910, 0.0, %v1217
          %v1219 = vrot.slane %v1210, 4
          %v1220 = vsel %vm910, 0.0, %v1219
          %v1221 = vrot.slane %v1214, 4
          %v1222 = vsel %vm910, 0.0, %v1221
          %v1223 = vsel %vm910, %v1217, %v1198
          %v1225 = vunpack.c.l.s4 1983009808
          %v1226 = vunpack.c.0.s8 %v1225
          %v1227 = vperm.slane %v1223, %v1226
          %v1228 = vrot.slane %v1218, 4
          %v1229 = vsel %vm910, %v1228, %v1216
          %v1231 = vunpack.c.l.s4 1983009808
          %v1232 = vunpack.c.0.s8 %v1231
          %v1233 = vperm.slane %v1229, %v1232
          %v1234 = vsel %vm910, %v1221, %v1210
          %v1236 = vunpack.c.l.s4 1983009808
          %v1237 = vunpack.c.0.s8 %v1236
          %v1238 = vperm.slane %v1234, %v1237
          %v1239 = vrot.slane %v1222, 4
          %v1240 = vsel %vm910, %v1239, %v1220
          %v1242 = vunpack.c.l.s4 1983009808
          %v1243 = vunpack.c.0.s8 %v1242
          %v1244 = vperm.slane %v1240, %v1243
          %v1245 = vrot.slane %v1233, 4
          %v1246 = vsel %vm910, %v1245, %v1227
          %v1247 = vrot.slane %v1227, 4
          %v1248 = vsel %vm910, %v1233, %v1247
          %v1250 = vunpack.c.l.s4 1934713408
          %v1251 = vunpack.c.0.s8 %v1250
          %v1252 = vperm.slane %v1246, %v1251
          %v1254 = vunpack.c.l.s4 1934713408
          %v1255 = vunpack.c.0.s8 %v1254
          %v1256 = vperm.slane %v1248, %v1255
          %v1257 = vrot.slane %v1244, 4
          %v1258 = vsel %vm910, %v1257, %v1238
          %v1259 = vrot.slane %v1238, 4
          %v1260 = vsel %vm910, %v1244, %v1259
          %v1262 = vunpack.c.l.s4 1934713408
          %v1263 = vunpack.c.0.s8 %v1262
          %v1264 = vperm.slane %v1258, %v1263
          %v1266 = vunpack.c.l.s4 1934713408
          %v1267 = vunpack.c.0.s8 %v1266
          %v1268 = vperm.slane %v1260, %v1267
          %v1269 = vrot.slane %v1264, 4
          %v1270 = vsel %vm910, %v1269, %v1252
          %v1271 = vrot.slane %v1252, 4
          %v1272 = vsel %vm910, %v1264, %v1271
          %v1273 = vrot.slane %v1268, 4
          %v1274 = vsel %vm910, %v1273, %v1256
          %v1275 = vrot.slane %v1256, 4
          %v1276 = vsel %vm910, %v1268, %v1275
          %v1277 = vpack.c.bf16 %v1270, %v1270
          %v1278 = vpack.c.bf16 %v1272, %v1272
          %v1279 = vpack.c.bf16 %v1274, %v1274
          %v1280 = vpack.c.bf16 %v1276, %v1276
          %1281 = vst.msk [vmem:[#allocation3] sm:$0xf] %vm1152, %v1277
          %1282 = vst.msk [vmem:[#allocation3 + $0x4] sm:$0xf] %vm1152, %v1278
          %1283 = vst.msk [vmem:[#allocation3 + $0x8] sm:$0xf] %vm1152, %v1279
          %1284 = vst.msk [vmem:[#allocation3 + $0xc] sm:$0xf] %vm1152, %v1280
        $region156: #{tpu_custom_call.1} parent=95 // pred_fallthru
          _
        %s1285 = smul.u32 %s46, 8
        %s1286 = scalar_lea.vmem %s821, %s1285
        %v1287 = vld [vmem:[%s1286] sm:$0xff]
        %v1288 = vpack.c.bf16 %v1287, %v1287
        %v1289 = vld [vmem:[%s1] sm:$0xf]
        %v1290 = vld [vmem:[%s1 + $0x4] sm:$0xf]
        %v1291 = vld [vmem:[%s1 + $0x8] sm:$0xf]
        %v1292 = vld [vmem:[%s1 + $0xc] sm:$0xf]
        %v1293 = vld [vmem:[#allocation9] sm:$0x1]
        %v1295 = vperm.slane %v1293, 0
        %v1301 = vunpack.c.l.b16 %v1289
        %v1302 = vunpack.c.l.b16 %v1290
        %v1303 = vunpack.c.l.b16 %v1291
        %v1304 = vunpack.c.l.b16 %v1292
        %v1305 = vpack.c.b16 %v1302, %v1301
        %v1306 = vpack.c.b16 %v1304, %v1303
        %vm1309 = vcmask 261120
        %v1311 = vsel %vm1309, %v1288, 0
        %1313 = vmatpush.bf16.msra.mxu0 0
        %1314 = vmatpush.bf16.msra.mxu0 0
        %1315 = vmatpush.bf16.msra.mxu0 0
        %1316 = vmatpush.bf16.msra.mxu0 0
        %1317 = vmatpush.bf16.msra.mxu0 0
        %1318 = vmatpush.bf16.msra.mxu0 0
        %1319 = vmatpush.bf16.msra.mxu0 %v1306
        %1320 = vmatpush.bf16.msra.mxu0 %v1305
        %1321 = vmatmul.bf16.gmra.mxu0 %v1311
        %v1322 = vpop.f32.mrf.mxu0
        %v1323 = vadd.f32 %v1295, %v1322
        %v1324 = vpop.f32.mrf.mxu0
        %1325 = vdwg.mxu0
        %v1326 = vmul.f32 %v1323, 0.35355338
        %1328 = vrot.lane.b32.xlu0 %v1326, 120
        %v1329 = vpop.permute.xlu0 %1328
        %1331 = vrot.lane.b32.xlu0 %v1326, 112
        %v1332 = vpop.permute.xlu0 %1331
        %1334 = vrot.lane.b32.xlu0 %v1326, 104
        %v1335 = vpop.permute.xlu0 %1334
        %v1337 = vrot.slane %v1332, 4
        %vm1338 = vcmask 1047556
        %v1339 = vsel %vm1338, %v1337, %v1326
        %v1340 = vrot.slane %v1326, 4
        %v1341 = vsel %vm1338, %v1332, %v1340
        %v1343 = vunpack.c.l.s4 1983009808
        %v1344 = vunpack.c.0.s8 %v1343
        %v1345 = vperm.slane %v1339, %v1344
        %v1347 = vunpack.c.l.s4 1983009808
        %v1348 = vunpack.c.0.s8 %v1347
        %v1349 = vperm.slane %v1341, %v1348
        %v1350 = vrot.slane %v1335, 4
        %v1351 = vsel %vm1338, %v1350, %v1329
        %v1352 = vrot.slane %v1329, 4
        %v1353 = vsel %vm1338, %v1335, %v1352
        %v1355 = vunpack.c.l.s4 1983009808
        %v1356 = vunpack.c.0.s8 %v1355
        %v1357 = vperm.slane %v1351, %v1356
        %v1359 = vunpack.c.l.s4 1983009808
        %v1360 = vunpack.c.0.s8 %v1359
        %v1361 = vperm.slane %v1353, %v1360
        %v1362 = vrot.slane %v1357, 4
        %v1363 = vsel %vm1338, %v1362, %v1345
        %v1364 = vrot.slane %v1345, 4
        %v1365 = vsel %vm1338, %v1357, %v1364
        %v1367 = vunpack.c.l.s4 1934713408
        %v1368 = vunpack.c.0.s8 %v1367
        %v1369 = vperm.slane %v1363, %v1368
        %v1371 = vunpack.c.l.s4 1934713408
        %v1372 = vunpack.c.0.s8 %v1371
        %v1373 = vperm.slane %v1365, %v1372
        %v1374 = vrot.slane %v1361, 4
        %v1375 = vsel %vm1338, %v1374, %v1349
        %v1376 = vrot.slane %v1349, 4
        %v1377 = vsel %vm1338, %v1361, %v1376
        %v1379 = vunpack.c.l.s4 1934713408
        %v1380 = vunpack.c.0.s8 %v1379
        %v1381 = vperm.slane %v1375, %v1380
        %v1383 = vunpack.c.l.s4 1934713408
        %v1384 = vunpack.c.0.s8 %v1383
        %v1385 = vperm.slane %v1377, %v1384
        %v1386 = vrot.slane %v1369, 4
        %v1387 = vsel %vm1338, 0.0, %v1386
        %v1388 = vrot.slane %v1373, 4
        %v1389 = vsel %vm1338, 0.0, %v1388
        %v1390 = vrot.slane %v1381, 4
        %v1391 = vsel %vm1338, 0.0, %v1390
        %v1392 = vrot.slane %v1385, 4
        %v1393 = vsel %vm1338, 0.0, %v1392
        %v1394 = vsel %vm1338, %v1388, %v1369
        %v1396 = vunpack.c.l.s4 1983009808
        %v1397 = vunpack.c.0.s8 %v1396
        %v1398 = vperm.slane %v1394, %v1397
        %v1399 = vrot.slane %v1389, 4
        %v1400 = vsel %vm1338, %v1399, %v1387
        %v1402 = vunpack.c.l.s4 1983009808
        %v1403 = vunpack.c.0.s8 %v1402
        %v1404 = vperm.slane %v1400, %v1403
        %v1405 = vsel %vm1338, %v1392, %v1381
        %v1407 = vunpack.c.l.s4 1983009808
        %v1408 = vunpack.c.0.s8 %v1407
        %v1409 = vperm.slane %v1405, %v1408
        %v1410 = vrot.slane %v1393, 4
        %v1411 = vsel %vm1338, %v1410, %v1391
        %v1413 = vunpack.c.l.s4 1983009808
        %v1414 = vunpack.c.0.s8 %v1413
        %v1415 = vperm.slane %v1411, %v1414
        %v1416 = vrot.slane %v1404, 4
        %v1417 = vsel %vm1338, %v1416, %v1398
        %v1418 = vrot.slane %v1398, 4
        %v1419 = vsel %vm1338, %v1404, %v1418
        %v1421 = vunpack.c.l.s4 1934713408
        %v1422 = vunpack.c.0.s8 %v1421
        %v1423 = vperm.slane %v1417, %v1422
        %v1425 = vunpack.c.l.s4 1934713408
        %v1426 = vunpack.c.0.s8 %v1425
        %v1427 = vperm.slane %v1419, %v1426
        %v1428 = vrot.slane %v1415, 4
        %v1429 = vsel %vm1338, %v1428, %v1409
        %v1430 = vrot.slane %v1409, 4
        %v1431 = vsel %vm1338, %v1415, %v1430
        %v1433 = vunpack.c.l.s4 1934713408
        %v1434 = vunpack.c.0.s8 %v1433
        %v1435 = vperm.slane %v1429, %v1434
        %v1437 = vunpack.c.l.s4 1934713408
        %v1438 = vunpack.c.0.s8 %v1437
        %v1439 = vperm.slane %v1431, %v1438
        %v1440 = vrot.slane %v1435, 4
        %v1441 = vsel %vm1338, %v1440, %v1423
        %v1442 = vrot.slane %v1423, 4
        %v1443 = vsel %vm1338, %v1435, %v1442
        %v1444 = vrot.slane %v1439, 4
        %v1445 = vsel %vm1338, %v1444, %v1427
        %v1446 = vrot.slane %v1427, 4
        %v1447 = vsel %vm1338, %v1439, %v1446
        %v1448 = vpack.c.bf16 %v1441, %v1441
        %v1449 = vpack.c.bf16 %v1443, %v1443
        %v1450 = vpack.c.bf16 %v1445, %v1445
        %v1451 = vpack.c.bf16 %v1447, %v1447
        %v1452 = vld [vmem:[#allocation2] sm:$0xf]
        %v1453 = vld [vmem:[#allocation2 + $0x4] sm:$0xf]
        %v1454 = vld [vmem:[#allocation2 + $0x8] sm:$0xf]
        %v1455 = vld [vmem:[#allocation2 + $0xc] sm:$0xf]
        %vm1456 = vcmask 64512
        %v1458 = vsel %vm1456, %v1448, 0
        %vm1460 = vcmask 1043456
        %v1462 = vsel %vm1460, %v1452, 0
        %1464 = vmatpush.bf16.msra.mxu0 0
        %1465 = vmatpush.bf16.msra.mxu0 0
        %1466 = vmatpush.bf16.msra.mxu0 0
        %1467 = vmatpush.bf16.msra.mxu0 0
        %1468 = vmatpush.bf16.msra.mxu0 0
        %1469 = vmatpush.bf16.msra.mxu0 0
        %1470 = vmatpush.bf16.msra.mxu0 0
        %1471 = vmatpush.bf16.msra.mxu0 %v1462
        %1472 = vmatmul.bf16.gmra.mxu0 %v1458
        %v1473 = vpop.f32.mrf.mxu0
        %v1474 = vadd.f32 0.0, %v1473
        %v1475 = vpop.f32.mrf.mxu0
        %1476 = vdwg.mxu0
        %v1478 = vsel %vm1456, %v1449, 0
        %v1481 = vsel %vm1460, %v1453, 0
        %1483 = vmatpush.bf16.msra.mxu0 0
        %1484 = vmatpush.bf16.msra.mxu0 0
        %1485 = vmatpush.bf16.msra.mxu0 0
        %1486 = vmatpush.bf16.msra.mxu0 0
        %1487 = vmatpush.bf16.msra.mxu0 0
        %1488 = vmatpush.bf16.msra.mxu0 0
        %1489 = vmatpush.bf16.msra.mxu0 0
        %1490 = vmatpush.bf16.msra.mxu0 %v1481
        %1491 = vmatmul.bf16.gmra.mxu0 %v1478
        %v1492 = vpop.f32.mrf.mxu0
        %v1493 = vadd.f32 0.0, %v1492
        %v1494 = vpop.f32.mrf.mxu0
        %1495 = vdwg.mxu0
        %v1497 = vsel %vm1456, %v1450, 0
        %v1500 = vsel %vm1460, %v1454, 0
        %1502 = vmatpush.bf16.msra.mxu0 0
        %1503 = vmatpush.bf16.msra.mxu0 0
        %1504 = vmatpush.bf16.msra.mxu0 0
        %1505 = vmatpush.bf16.msra.mxu0 0
        %1506 = vmatpush.bf16.msra.mxu0 0
        %1507 = vmatpush.bf16.msra.mxu0 0
        %1508 = vmatpush.bf16.msra.mxu0 0
        %1509 = vmatpush.bf16.msra.mxu0 %v1500
        %1510 = vmatmul.bf16.gmra.mxu0 %v1497
        %v1511 = vpop.f32.mrf.mxu0
        %v1512 = vadd.f32 0.0, %v1511
        %v1513 = vpop.f32.mrf.mxu0
        %1514 = vdwg.mxu0
        %v1516 = vsel %vm1456, %v1451, 0
        %v1519 = vsel %vm1460, %v1455, 0
        %1521 = vmatpush.bf16.msra.mxu0 0
        %1522 = vmatpush.bf16.msra.mxu0 0
        %1523 = vmatpush.bf16.msra.mxu0 0
        %1524 = vmatpush.bf16.msra.mxu0 0
        %1525 = vmatpush.bf16.msra.mxu0 0
        %1526 = vmatpush.bf16.msra.mxu0 0
        %1527 = vmatpush.bf16.msra.mxu0 0
        %1528 = vmatpush.bf16.msra.mxu0 %v1519
        %1529 = vmatmul.bf16.gmra.mxu0 %v1516
        %v1530 = vpop.f32.mrf.mxu0
        %v1531 = vadd.f32 0.0, %v1530
        %v1532 = vpop.f32.mrf.mxu0
        %1533 = vdwg.mxu0
        %v1534 = vsel %vm1456, %v1474, -inf
        %1535 = vmax.xlane.f32.xlu0 %v1534
        %v1536 = vpop.xlane.xlu0 %1535
        %v1537 = vsel %vm1456, %v1493, -inf
        %1538 = vmax.xlane.f32.xlu0 %v1537
        %v1539 = vpop.xlane.xlu0 %1538
        %v1540 = vsel %vm1456, %v1512, -inf
        %1541 = vmax.xlane.f32.xlu0 %v1540
        %v1542 = vpop.xlane.xlu0 %1541
        %v1543 = vsel %vm1456, %v1531, -inf
        %1544 = vmax.xlane.f32.xlu0 %v1543
        %v1545 = vpop.xlane.xlu0 %1544
        %v1546 = vsub.f32 %v1474, %v1536
        %v1547 = vsub.f32 %v1493, %v1539
        %v1548 = vsub.f32 %v1512, %v1542
        %v1549 = vsub.f32 %v1531, %v1545
        %v1550 = vmul.f32 %v1546, 1.442695
        %v1551 = vpow.pop %v1550
        %v1552 = vmul.f32 %v1547, 1.442695
        %v1553 = vpow.pop %v1552
        %v1554 = vmul.f32 %v1548, 1.442695
        %v1555 = vpow.pop %v1554
        %v1556 = vmul.f32 %v1549, 1.442695
        %v1557 = vpow.pop %v1556
        %v1558 = vsel %vm1456, %v1551, 0.0
        %1559 = vadd.xlane.f32.xlu0 %v1558
        %v1560 = vpop.xlane.xlu0 %1559
        %v1561 = vsel %vm1456, %v1553, 0.0
        %1562 = vadd.xlane.f32.xlu0 %v1561
        %v1563 = vpop.xlane.xlu0 %1562
        %v1564 = vsel %vm1456, %v1555, 0.0
        %1565 = vadd.xlane.f32.xlu0 %v1564
        %v1566 = vpop.xlane.xlu0 %1565
        %v1567 = vsel %vm1456, %v1557, 0.0
        %1568 = vadd.xlane.f32.xlu0 %v1567
        %v1569 = vpop.xlane.xlu0 %1568
        %v1570 = vpack.c.bf16 %v1551, %v1551
        %v1571 = vpack.c.bf16 %v1553, %v1553
        %v1572 = vpack.c.bf16 %v1555, %v1555
        %v1573 = vpack.c.bf16 %v1557, %v1557
        %v1574 = vld [vmem:[#allocation3] sm:$0xf]
        %v1575 = vld [vmem:[#allocation3 + $0x4] sm:$0xf]
        %v1576 = vld [vmem:[#allocation3 + $0x8] sm:$0xf]
        %v1577 = vld [vmem:[#allocation3 + $0xc] sm:$0xf]
        %v1579 = vsel %vm1456, %v1570, 0
        %v1582 = vsel %vm1460, %v1574, 0
        %1584 = vmatpush.bf16.msra.mxu0 0
        %1585 = vmatpush.bf16.msra.mxu0 0
        %1586 = vmatpush.bf16.msra.mxu0 0
        %1587 = vmatpush.bf16.msra.mxu0 0
        %1588 = vmatpush.bf16.msra.mxu0 0
        %1589 = vmatpush.bf16.msra.mxu0 0
        %1590 = vmatpush.bf16.msra.mxu0 0
        %1591 = vmatpush.bf16.msra.mxu0 %v1582
        %1592 = vmatmul.bf16.gmra.mxu0 %v1579
        %v1593 = vpop.f32.mrf.mxu0
        %v1594 = vadd.f32 0.0, %v1593
        %v1595 = vpop.f32.mrf.mxu0
        %1596 = vdwg.mxu0
        %v1598 = vsel %vm1456, %v1571, 0
        %v1601 = vsel %vm1460, %v1575, 0
        %1603 = vmatpush.bf16.msra.mxu0 0
        %1604 = vmatpush.bf16.msra.mxu0 0
        %1605 = vmatpush.bf16.msra.mxu0 0
        %1606 = vmatpush.bf16.msra.mxu0 0
        %1607 = vmatpush.bf16.msra.mxu0 0
        %1608 = vmatpush.bf16.msra.mxu0 0
        %1609 = vmatpush.bf16.msra.mxu0 0
        %1610 = vmatpush.bf16.msra.mxu0 %v1601
        %1611 = vmatmul.bf16.gmra.mxu0 %v1598
        %v1612 = vpop.f32.mrf.mxu0
        %v1613 = vadd.f32 0.0, %v1612
        %v1614 = vpop.f32.mrf.mxu0
        %1615 = vdwg.mxu0
        %v1617 = vsel %vm1456, %v1572, 0
        %v1620 = vsel %vm1460, %v1576, 0
        %1622 = vmatpush.bf16.msra.mxu0 0
        %1623 = vmatpush.bf16.msra.mxu0 0
        %1624 = vmatpush.bf16.msra.mxu0 0
        %1625 = vmatpush.bf16.msra.mxu0 0
        %1626 = vmatpush.bf16.msra.mxu0 0
        %1627 = vmatpush.bf16.msra.mxu0 0
        %1628 = vmatpush.bf16.msra.mxu0 0
        %1629 = vmatpush.bf16.msra.mxu0 %v1620
        %1630 = vmatmul.bf16.gmra.mxu0 %v1617
        %v1631 = vpop.f32.mrf.mxu0
        %v1632 = vadd.f32 0.0, %v1631
        %v1633 = vpop.f32.mrf.mxu0
        %1634 = vdwg.mxu0
        %v1636 = vsel %vm1456, %v1573, 0
        %v1639 = vsel %vm1460, %v1577, 0
        %1641 = vmatpush.bf16.msra.mxu0 0
        %1642 = vmatpush.bf16.msra.mxu0 0
        %1643 = vmatpush.bf16.msra.mxu0 0
        %1644 = vmatpush.bf16.msra.mxu0 0
        %1645 = vmatpush.bf16.msra.mxu0 0
        %1646 = vmatpush.bf16.msra.mxu0 0
        %1647 = vmatpush.bf16.msra.mxu0 0
        %1648 = vmatpush.bf16.msra.mxu0 %v1639
        %1649 = vmatmul.bf16.gmra.mxu0 %v1636
        %v1650 = vpop.f32.mrf.mxu0
        %v1651 = vadd.f32 0.0, %v1650
        %v1652 = vpop.f32.mrf.mxu0
        %1653 = vdwg.mxu0
        %v1654 = vrcp.pop %v1560
        %v1655 = vrcp.pop %v1563
        %v1656 = vrcp.pop %v1566
        %v1657 = vrcp.pop %v1569
        %v1658 = vmul.f32 %v1594, %v1654
        %v1659 = vmul.f32 %v1613, %v1655
        %v1660 = vmul.f32 %v1632, %v1656
        %v1661 = vmul.f32 %v1651, %v1657
        %v1662 = vrot.slane %v1660, 4
        %v1663 = vsel %vm1338, %v1662, %v1658
        %v1664 = vrot.slane %v1658, 4
        %v1665 = vsel %vm1338, %v1660, %v1664
        %v1667 = vunpack.c.l.s4 1983009808
        %v1668 = vunpack.c.0.s8 %v1667
        %v1669 = vperm.slane %v1663, %v1668
        %v1671 = vunpack.c.l.s4 1983009808
        %v1672 = vunpack.c.0.s8 %v1671
        %v1673 = vperm.slane %v1665, %v1672
        %v1674 = vrot.slane %v1661, 4
        %v1675 = vsel %vm1338, %v1674, %v1659
        %v1676 = vrot.slane %v1659, 4
        %v1677 = vsel %vm1338, %v1661, %v1676
        %v1679 = vunpack.c.l.s4 1983009808
        %v1680 = vunpack.c.0.s8 %v1679
        %v1681 = vperm.slane %v1675, %v1680
        %v1683 = vunpack.c.l.s4 1983009808
        %v1684 = vunpack.c.0.s8 %v1683
        %v1685 = vperm.slane %v1677, %v1684
        %v1686 = vrot.slane %v1681, 4
        %v1687 = vsel %vm1338, %v1686, %v1669
        %v1688 = vrot.slane %v1669, 4
        %v1689 = vsel %vm1338, %v1681, %v1688
        %v1691 = vunpack.c.l.s4 1934713408
        %v1692 = vunpack.c.0.s8 %v1691
        %v1693 = vperm.slane %v1687, %v1692
        %v1695 = vunpack.c.l.s4 1934713408
        %v1696 = vunpack.c.0.s8 %v1695
        %v1697 = vperm.slane %v1689, %v1696
        %v1698 = vrot.slane %v1685, 4
        %v1699 = vsel %vm1338, %v1698, %v1673
        %v1700 = vrot.slane %v1673, 4
        %v1701 = vsel %vm1338, %v1685, %v1700
        %v1703 = vunpack.c.l.s4 1934713408
        %v1704 = vunpack.c.0.s8 %v1703
        %v1705 = vperm.slane %v1699, %v1704
        %v1707 = vunpack.c.l.s4 1934713408
        %v1708 = vunpack.c.0.s8 %v1707
        %v1709 = vperm.slane %v1701, %v1708
        %v1710 = vrot.slane %v1693, 4
        %v1711 = vsel %vm1338, 0.0, %v1710
        %v1712 = vrot.slane %v1697, 4
        %v1713 = vsel %vm1338, 0.0, %v1712
        %v1714 = vrot.slane %v1705, 4
        %v1715 = vsel %vm1338, 0.0, %v1714
        %v1716 = vrot.slane %v1709, 4
        %v1717 = vsel %vm1338, 0.0, %v1716
        %v1718 = vsel %vm1338, %v1712, %v1693
        %v1720 = vunpack.c.l.s4 1983009808
        %v1721 = vunpack.c.0.s8 %v1720
        %v1722 = vperm.slane %v1718, %v1721
        %v1723 = vrot.slane %v1713, 4
        %v1724 = vsel %vm1338, %v1723, %v1711
        %v1726 = vunpack.c.l.s4 1983009808
        %v1727 = vunpack.c.0.s8 %v1726
        %v1728 = vperm.slane %v1724, %v1727
        %v1729 = vsel %vm1338, %v1716, %v1705
        %v1731 = vunpack.c.l.s4 1983009808
        %v1732 = vunpack.c.0.s8 %v1731
        %v1733 = vperm.slane %v1729, %v1732
        %v1734 = vrot.slane %v1717, 4
        %v1735 = vsel %vm1338, %v1734, %v1715
        %v1737 = vunpack.c.l.s4 1983009808
        %v1738 = vunpack.c.0.s8 %v1737
        %v1739 = vperm.slane %v1735, %v1738
        %v1740 = vrot.slane %v1728, 4
        %v1741 = vsel %vm1338, %v1740, %v1722
        %v1742 = vrot.slane %v1722, 4
        %v1743 = vsel %vm1338, %v1728, %v1742
        %v1745 = vunpack.c.l.s4 1934713408
        %v1746 = vunpack.c.0.s8 %v1745
        %v1747 = vperm.slane %v1741, %v1746
        %v1749 = vunpack.c.l.s4 1934713408
        %v1750 = vunpack.c.0.s8 %v1749
        %v1751 = vperm.slane %v1743, %v1750
        %v1752 = vrot.slane %v1739, 4
        %v1753 = vsel %vm1338, %v1752, %v1733
        %v1754 = vrot.slane %v1733, 4
        %v1755 = vsel %vm1338, %v1739, %v1754
        %v1757 = vunpack.c.l.s4 1934713408
        %v1758 = vunpack.c.0.s8 %v1757
        %v1759 = vperm.slane %v1753, %v1758
        %v1761 = vunpack.c.l.s4 1934713408
        %v1762 = vunpack.c.0.s8 %v1761
        %v1763 = vperm.slane %v1755, %v1762
        %v1764 = vrot.slane %v1759, 4
        %v1765 = vsel %vm1338, %v1764, %v1747
        %v1766 = vrot.slane %v1747, 4
        %v1767 = vsel %vm1338, %v1759, %v1766
        %v1768 = vrot.slane %v1763, 4
        %v1769 = vsel %vm1338, %v1768, %v1751
        %v1770 = vrot.slane %v1751, 4
        %v1771 = vsel %vm1338, %v1763, %v1770
        %1773 = vrot.lane.b32.xlu0 %v1767, 8
        %v1774 = vpop.permute.xlu0 %1773
        %1777 = vrot.lane.b32.xlu0 %v1769, 16
        %v1778 = vpop.permute.xlu0 %1777
        %1781 = vrot.lane.b32.xlu0 %v1771, 24
        %v1782 = vpop.permute.xlu0 %1781
        %v1784 = vsel %vm1456, %v1765, %v1774
        %vm1785 = vcmask 130048
        %v1786 = vsel %vm1785, %v1784, %v1778
        %vm1787 = vcmask 195584
        %v1788 = vsel %vm1787, %v1786, %v1782
        %v1789 = vpack.c.bf16 %v1788, %v1788
        %v1790 = vld [vmem:[#allocation7] sm:$0xf]
        %v1791 = vld [vmem:[#allocation7 + $0x4] sm:$0xf]
        %v1792 = vld [vmem:[#allocation7 + $0x8] sm:$0xf]
        %v1793 = vld [vmem:[#allocation7 + $0xc] sm:$0xf]
        %v1794 = vld [vmem:[#allocation13] sm:$0x1]
        %v1796 = vperm.slane %v1794, 0
        %v1802 = vunpack.c.l.b16 %v1790
        %v1803 = vunpack.c.l.b16 %v1791
        %v1804 = vunpack.c.l.b16 %v1792
        %v1805 = vunpack.c.l.b16 %v1793
        %v1806 = vpack.c.b16 %v1803, %v1802
        %v1807 = vpack.c.b16 %v1805, %v1804
        %v1811 = vsel %vm1309, %v1789, 0
        %1813 = vmatpush.bf16.msra.mxu0 0
        %1814 = vmatpush.bf16.msra.mxu0 0
        %1815 = vmatpush.bf16.msra.mxu0 0
        %1816 = vmatpush.bf16.msra.mxu0 0
        %1817 = vmatpush.bf16.msra.mxu0 0
        %1818 = vmatpush.bf16.msra.mxu0 0
        %1819 = vmatpush.bf16.msra.mxu0 %v1807
        %1820 = vmatpush.bf16.msra.mxu0 %v1806
        %1821 = vmatmul.bf16.gmra.mxu0 %v1811
        %v1822 = vpop.f32.mrf.mxu0
        %v1823 = vadd.f32 %v1796, %v1822
        %v1824 = vpop.f32.mrf.mxu0
        %1825 = vdwg.mxu0
        %v1826 = vadd.f32 %v1287, %v1823
        %v1827 = vld [vmem:[#allocation15] sm:$0x1]
        %v1828 = vld [vmem:[#allocation16] sm:$0x1]
        %v1829 = vsel %vm1309, %v1826, 0.0
        %1830 = vadd.xlane.f32.xlu0 %v1829
        %v1831 = vpop.xlane.xlu0 %1830
        %v1832 = vrcp.pop 32.0
        %v1833 = vmul.f32 32.0, %v1832
        %v1834 = vsub.f32 1.0, %v1833
        %v1835 = vmul.f32 %v1832, %v1834
        %v1836 = vadd.f32 %v1832, %v1835
        %vm1837 = vweird.f32 %v1832
        %v1838 = vsel %vm1837, %v1832, %v1836
        %v1839 = vmul.f32 %v1831, %v1838
        %v1840 = vsub.f32 %v1826, %v1839
        %v1841 = vmul.f32 %v1840, %v1840
        %v1842 = vsel %vm1309, %v1841, 0.0
        %1843 = vadd.xlane.f32.xlu0 %v1842
        %v1844 = vpop.xlane.xlu0 %1843
        %v1845 = vmul.f32 %v1844, %v1838
        %v1846 = vadd.f32 %v1845, 1e-05
        %v1847 = vrsqrt.pop %v1846
        %v1848 = vmul.f32 %v1847, %v1846
        %v1849 = vmul.f32 %v1848, %v1847
        %v1850 = vmul.f32 0.5, %v1849
        %v1851 = vsub.f32 1.5, %v1850
        %v1852 = vmul.f32 %v1847, %v1851
        %vm1853 = vweird.f32 %v1846
        %vm1854 = vweird.f32 %v1847
        %vm1855 = vmor %vm1853, %vm1854
        %v1856 = vsel %vm1855, %v1847, %v1852
        %v1857 = vmul.f32 %v1840, %v1856
        %v1859 = vperm.slane %v1827, 0
        %v1861 = vmul.f32 %v1857, %v1859
        %v1863 = vperm.slane %v1828, 0
        %v1865 = vadd.f32 %v1861, %v1863
        %v1866 = vpack.c.bf16 %v1865, %v1865
        %v1867 = vld [vmem:[#allocation21] sm:$0xf]
        %v1868 = vld [vmem:[#allocation21 + $0x4] sm:$0xf]
        %v1869 = vld [vmem:[#allocation21 + $0x8] sm:$0xf]
        %v1870 = vld [vmem:[#allocation21 + $0xc] sm:$0xf]
        %v1871 = vld [vmem:[#allocation22] sm:$0x1]
        %v1873 = vperm.slane %v1871, 0
        %v1879 = vunpack.c.l.b16 %v1867
        %v1880 = vunpack.c.l.b16 %v1868
        %v1881 = vunpack.c.l.b16 %v1869
        %v1882 = vunpack.c.l.b16 %v1870
        %v1883 = vpack.c.b16 %v1880, %v1879
        %v1884 = vpack.c.b16 %v1882, %v1881
        %v1888 = vsel %vm1309, %v1866, 0
        %1890 = vmatpush.bf16.msra.mxu0 0
        %1891 = vmatpush.bf16.msra.mxu0 0
        %1892 = vmatpush.bf16.msra.mxu0 0
        %1893 = vmatpush.bf16.msra.mxu0 0
        %1894 = vmatpush.bf16.msra.mxu0 0
        %1895 = vmatpush.bf16.msra.mxu0 0
        %1896 = vmatpush.bf16.msra.mxu0 %v1884
        %1897 = vmatpush.bf16.msra.mxu0 %v1883
        %1898 = vmatmul.bf16.gmra.mxu0 %v1888
        %v1899 = vpop.f32.mrf.mxu0
        %v1900 = vadd.f32 %v1873, %v1899
        %v1901 = vpop.f32.mrf.mxu0
        %1902 = vdwg.mxu0
        %v1903 = vmax.f32 %v1900, 0.0
        %v1904 = vld [vmem:[#allocation24] sm:$0x1]
        %v1905 = vld [vmem:[#allocation25] sm:$0x1]
        %vm1906 = vcmask 523264
        %v1907 = vsel %vm1906, %v1903, 0.0
        %1908 = vadd.xlane.f32.xlu0 %v1907
        %v1909 = vpop.xlane.xlu0 %1908
        %v1910 = vrcp.pop 64.0
        %v1911 = vmul.f32 64.0, %v1910
        %v1912 = vsub.f32 1.0, %v1911
        %v1913 = vmul.f32 %v1910, %v1912
        %v1914 = vadd.f32 %v1910, %v1913
        %vm1915 = vweird.f32 %v1910
        %v1916 = vsel %vm1915, %v1910, %v1914
        %v1917 = vmul.f32 %v1909, %v1916
        %v1918 = vsub.f32 %v1903, %v1917
        %v1919 = vmul.f32 %v1918, %v1918
        %v1920 = vsel %vm1906, %v1919, 0.0
        %1921 = vadd.xlane.f32.xlu0 %v1920
        %v1922 = vpop.xlane.xlu0 %1921
        %v1923 = vmul.f32 %v1922, %v1916
        %v1924 = vadd.f32 %v1923, 1e-05
        %v1925 = vrsqrt.pop %v1924
        %v1926 = vmul.f32 %v1925, %v1924
        %v1927 = vmul.f32 %v1926, %v1925
        %v1928 = vmul.f32 0.5, %v1927
        %v1929 = vsub.f32 1.5, %v1928
        %v1930 = vmul.f32 %v1925, %v1929
        %vm1931 = vweird.f32 %v1924
        %vm1932 = vweird.f32 %v1925
        %vm1933 = vmor %vm1931, %vm1932
        %v1934 = vsel %vm1933, %v1925, %v1930
        %v1935 = vmul.f32 %v1918, %v1934
        %v1937 = vperm.slane %v1904, 0
        %v1939 = vmul.f32 %v1935, %v1937
        %v1941 = vperm.slane %v1905, 0
        %v1943 = vadd.f32 %v1939, %v1941
        %v1944 = vpack.c.bf16 %v1943, %v1943
        %v1945 = vld [vmem:[%s17] sm:$0xf]
        %v1946 = vld [vmem:[%s17 + $0x4] sm:$0xf]
        %v1947 = vld [vmem:[%s17 + $0x8] sm:$0xf]
        %v1948 = vld [vmem:[%s17 + $0xc] sm:$0xf]
        %v1949 = vld [vmem:[%s17 + $0x10] sm:$0xf]
        %v1950 = vld [vmem:[%s17 + $0x14] sm:$0xf]
        %v1951 = vld [vmem:[%s17 + $0x18] sm:$0xf]
        %v1952 = vld [vmem:[%s17 + $0x1c] sm:$0xf]
        %v1953 = vld [vmem:[%s18] sm:$0x1]
        %v1955 = vperm.slane %v1953, 0
        %v1965 = vunpack.c.l.b16 %v1945
        %v1966 = vunpack.c.l.b16 %v1946
        %v1967 = vunpack.c.l.b16 %v1947
        %v1968 = vunpack.c.l.b16 %v1948
        %v1969 = vunpack.c.l.b16 %v1949
        %v1970 = vunpack.c.l.b16 %v1950
        %v1971 = vunpack.c.l.b16 %v1951
        %v1972 = vunpack.c.l.b16 %v1952
        %v1973 = vpack.c.b16 %v1966, %v1965
        %v1974 = vpack.c.b16 %v1968, %v1967
        %v1975 = vpack.c.b16 %v1970, %v1969
        %v1976 = vpack.c.b16 %v1972, %v1971
        %v1982 = vsel %vm1906, %v1944, 0
        %1984 = vmatpush.bf16.msra.mxu0 0
        %1985 = vmatpush.bf16.msra.mxu0 0
        %1986 = vmatpush.bf16.msra.mxu0 0
        %1987 = vmatpush.bf16.msra.mxu0 0
        %1988 = vmatpush.bf16.msra.mxu0 %v1976
        %1989 = vmatpush.bf16.msra.mxu0 %v1975
        %1990 = vmatpush.bf16.msra.mxu0 %v1974
        %1991 = vmatpush.bf16.msra.mxu0 %v1973
        %1992 = vmatmul.bf16.gmra.mxu0 %v1982
        %v1993 = vpop.f32.mrf.mxu0
        %v1994 = vadd.f32 %v1955, %v1993
        %v1995 = vpop.f32.mrf.mxu0
        %1996 = vdwg.mxu0
        %v1997 = vmax.f32 %v1994, 0.0
        %v1998 = vadd.f32 %v1865, %v1997
        %v1999 = vld [vmem:[#allocation18] sm:$0x1]
        %v2000 = vld [vmem:[#allocation19] sm:$0x1]
        %v2001 = vsel %vm1309, %v1998, 0.0
        %2002 = vadd.xlane.f32.xlu0 %v2001
        %v2003 = vpop.xlane.xlu0 %2002
        %v2004 = vmul.f32 %v2003, %v1838
        %v2005 = vsub.f32 %v1998, %v2004
        %v2006 = vmul.f32 %v2005, %v2005
        %v2007 = vsel %vm1309, %v2006, 0.0
        %2008 = vadd.xlane.f32.xlu0 %v2007
        %v2009 = vpop.xlane.xlu0 %2008
        %v2010 = vmul.f32 %v2009, %v1838
        %v2011 = vadd.f32 %v2010, 1e-05
        %v2012 = vrsqrt.pop %v2011
        %v2013 = vmul.f32 %v2012, %v2011
        %v2014 = vmul.f32 %v2013, %v2012
        %v2015 = vmul.f32 0.5, %v2014
        %v2016 = vsub.f32 1.5, %v2015
        %v2017 = vmul.f32 %v2012, %v2016
        %vm2018 = vweird.f32 %v2011
        %vm2019 = vweird.f32 %v2012
        %vm2020 = vmor %vm2018, %vm2019
        %v2021 = vsel %vm2020, %v2012, %v2017
        %v2022 = vmul.f32 %v2005, %v2021
        %v2024 = vperm.slane %v1999, 0
        %v2026 = vmul.f32 %v2022, %v2024
        %v2028 = vperm.slane %v2000, 0
        %v2030 = vadd.f32 %v2026, %v2028
        %2031 = vst.msk [vmem:[%s817] sm:$0xff] %vm1309, %v2030
        %s2032 = sand.u32 %s467, 1
        %s2033 = scalar_lea.sflag [#allocation6], %s2032
        %s2034 = sand.u32 %s467, 1
        %s2035 = smul.addr %s2034, 8
        %s2036 = scalar_lea.vmem [#allocation27], %s2035
        // Predicated region
        $region157: #{tpu_custom_call.1} parent=95 // pred_check
          %p2037 = pneg %p477
        $region158: #{tpu_custom_call.1} parent=95 // pred_check_branch
          %2039 = sbr.rel (%p2037) target = $region160
        $region159: #{tpu_custom_call.1} parent=95 // pred_region
          %2041 = vsyncadd %s2033, 0
          %s2042 = sadd.s32 %s46, %s45
          %s2043 = smul.addr %s2042, 8
          %s2044 = scalar_lea.hbm %s19, %s2043
          %s2046 = sshll.u32 %s2036, 4
          %s2047 = int_to_ptr.vmem [resolvable:$true] %s2046
          %s2048 = sshll.u32 %s2044, 4
          %s2049 = int_to_ptr.hbm [resolvable:$true] %s2048
          %2051 = dma.vmem_to_hbm [thread:$0]  %s2047, 128, %s2049, %s2033
        $region160: #{tpu_custom_call.1} parent=95 // pred_fallthru
          _
      $region96: #{tpu_custom_call.1} parent=5 // pred_fallthru
        _
      %p2052 = scmp.le.s32.totalorder 2, %s36
      // Predicated region
      $region161: #{tpu_custom_call.1} parent=5 // pred_check
        %p2053 = pneg %p2052
      $region162: #{tpu_custom_call.1} parent=5 // pred_check_branch
        %2055 = sbr.rel (%p2053) target = $region164
      $region163: #{tpu_custom_call.1} parent=5 // pred_region
        %s2056 = ssub.s32 %s36, 2
        // Predicated region
        $region165: #{tpu_custom_call.1} parent=163 // pred_check
          %p2057 = pneg %p483
        $region166: #{tpu_custom_call.1} parent=163 // pred_check_branch
          %2059 = sbr.rel (%p2057) target = $region168
        $region167: #{tpu_custom_call.1} parent=163 // pred_region
          %s2060 = sand.u32 %s468, 1
          %s2061 = scalar_lea.sflag [#allocation6], %s2060
          %s2062 = sand.u32 %s468, 1
          %s2063 = smul.addr %s2062, 8
          %s2064 = scalar_lea.vmem [#allocation27], %s2063
          %2066 = dma.done %s2061, 128
        $region168: #{tpu_custom_call.1} parent=163 // pred_fallthru
          _
      $region164: #{tpu_custom_call.1} parent=5 // pred_fallthru
        _
    $region6: #{tpu_custom_call.1} parent=1 // loop_footer
      %s40 = sadd.s32 1, %s36
    $region7: #{tpu_custom_call.1} parent=1 // loop_footer_branch
      %35 = sbr.rel target = $region3
    $region8: #{tpu_custom_call.1} parent=1 // loop_exit
      _
    %2067 = vsyncpa [#allocation5], 1
    %s2068 = scalar_lea.sflag [#allocation5], 1
    %2069 = vsyncpa %s2068, 1
    %2070 = vsyncpa [#allocation8], 1
    %2071 = vsyncpa [#allocation11], 1
    %2072 = vsyncpa [#allocation14], 1
    %2073 = vsyncpa [#allocation17], 1
    %2074 = vsyncpa [#allocation20], 1
    %2075 = vsyncpa [#allocation23], 1
    %2076 = vsyncpa [#allocation26], 1
    %2077 = vsyncpa [#allocation6], 1
    %s2078 = scalar_lea.sflag [#allocation6], 1
    %2079 = vsyncpa %s2078, 1

</llo_original>
